<compile_context>
chip_gen: v7x
topology: tpu7x:2x2x1
jax: 0.10.0
libtpu: 0.0.40
codegen_flags: <defaults>
</compile_context>

<pallas_src>
import functools

import numpy as np
import jax
import jax.numpy as jnp
from jax import lax
from jax.experimental import pallas as pl
from jax.experimental.pallas import tpu as pltpu

_LANE = 128
_SUB = 8


def _round_up(n, m):
    return ((n + m - 1) // m) * m


# --------------------------------------------------------------------------
# Kernel body
# --------------------------------------------------------------------------
def mlp_kernel(x_ref, p_ref, o_ref, *, F, HDR, Hp, Op):
    # ---- Layer 1: h = relu(x @ W1 + b1) ----------------------------------
    if F <= 8:
        # Tiny contraction (F == 2 here): a couple of VPU broadcast FMAs beat
        # an MXU pass (no MXU push + result-FIFO pop latency).
        h = p_ref[F:F + 1, 0:Hp]                          # bias row, (1, Hp)
        for f in range(F):                                # static unroll
            h = h + x_ref[:, f:f + 1] * p_ref[f:f + 1, 0:Hp]
    else:
        # Fallback for a wider input layer: use the MXU.
        h = jnp.dot(x_ref[...], p_ref[0:F, 0:Hp],
                    preferred_element_type=jnp.float32,
                    precision=lax.Precision.HIGHEST)
        h = h + p_ref[F:F + 1, 0:Hp]
    h = jnp.maximum(h, 0.0)                               # (TB, Hp); padded lanes stay 0

    # ---- Layer 2: y = h @ W2 + b2 (MXU, lane-dense) -----------------------
    # W2 is zero-padded to (Hp, Op), so the zero padded-hidden lanes contribute nothing.
    y = jnp.dot(h, p_ref[HDR:HDR + Hp, 0:Op],
                preferred_element_type=jnp.float32,
                precision=lax.Precision.HIGHEST)
    y = y + p_ref[HDR + Hp:HDR + Hp + 1, 0:Op]            # bias row, (1, Op)
    o_ref[...] = y.astype(o_ref.dtype)


# --------------------------------------------------------------------------
# One-time parameter packing (do this per parameter update, NOT per forward)
# --------------------------------------------------------------------------
def pack_params(w1, b1, w2, b2):
    """Pack (W1, b1, W2, b2) into a single zero-padded f32 slab.

    Weights are stored pre-transposed (in_features, out_features), so the kernel
    computes x @ W + b, equivalent to PyTorch's x @ W.T + b.
    Returns (slab_device_array, meta_dict).
    """
    w1 = np.asarray(w1, np.float32)
    b1 = np.asarray(b1, np.float32).reshape(-1)
    w2 = np.asarray(w2, np.float32)
    b2 = np.asarray(b2, np.float32).reshape(-1)

    F, H = w1.shape
    O = w2.shape[1]
    Hp = _round_up(H, _LANE)              # lane-dense hidden width
    Op = _round_up(O, _LANE)              # lane-dense output width
    W = max(Hp, Op)                       # slab lane width
    HDR = _round_up(F + 1, _SUB)          # W1+b1 header rows, sublane aligned
    P = _round_up(HDR + Hp + 1, _SUB)     # total slab rows, sublane aligned

    slab = np.zeros((P, W), np.float32)
    slab[0:F, 0:H] = w1
    slab[F, 0:H] = b1
    slab[HDR:HDR + H, 0:O] = w2
    slab[HDR + Hp, 0:O] = b2

    meta = dict(F=F, H=H, O=O, HDR=HDR, Hp=Hp, Op=Op, P=P, W=W)
    return jnp.asarray(slab), meta


# --------------------------------------------------------------------------
# Jitted forward (pad + pallas_call + fused output slice = one dispatch)
# --------------------------------------------------------------------------
@functools.partial(jax.jit,
                   static_argnames=("F", "HDR", "Hp", "Op", "O", "P", "W", "block_b"))
def _forward_impl(x, slab, *, F, HDR, Hp, Op, O, P, W, block_b):
    B = x.shape[0]

    # Batch tile: multiple of 8 (8,128 rule), capped to limit vreg pressure.
    TB = _round_up(min(block_b, _round_up(B, _SUB)), _SUB)
    Bp = _round_up(B, TB)
    if Bp != B:
        x = jnp.pad(x, ((0, Bp - B), (0, 0)))
    grid = (Bp // TB,)

    kern = functools.partial(mlp_kernel, F=F, HDR=HDR, Hp=Hp, Op=Op)
    out = pl.pallas_call(
        kern,
        out_shape=jax.ShapeDtypeStruct((Bp, Op), jnp.float32),
        grid_spec=pltpu.PrefetchScalarGridSpec(
            num_scalar_prefetch=0,
            grid=grid,
            in_specs=[
                pl.BlockSpec((TB, F), lambda i: (i, 0)),   # batch-tiled input
                pl.BlockSpec((P, W), lambda i: (0, 0)),    # resident param slab
            ],
            out_specs=pl.BlockSpec((TB, Op), lambda i: (i, 0)),
        ),
        compiler_params=pltpu.CompilerParams(
            dimension_semantics=("parallel",)),
    )(x, slab)

    # Slice fuses inside this jitted program (padded rows/lanes never read back
    # as a standalone dispatch).
    return out[:B, :O]


def net_forward(x, slab, meta, *, block_b=256):
    """x: (B, F) f32; slab/meta from pack_params() -> (B, O) f32."""
    return _forward_impl(
        x, slab,
        F=meta["F"], HDR=meta["HDR"], Hp=meta["Hp"], Op=meta["Op"],
        O=meta["O"], P=meta["P"], W=meta["W"], block_b=block_b)


def init_params(key, n_feature, n_hidden, n_output):
    """Deterministic init mimicking torch.nn.Linear (uniform(-1/sqrt(in), 1/sqrt(in)))."""
    k1, k2, k3, k4 = jax.random.split(key, 4)
    bound1 = 1.0 / jnp.sqrt(jnp.float32(n_feature))
    bound2 = 1.0 / jnp.sqrt(jnp.float32(n_hidden))
    # stored pre-transposed: (in, out)
    w1 = jax.random.uniform(k1, (n_feature, n_hidden), jnp.float32, -bound1, bound1)
    b1 = jax.random.uniform(k2, (n_hidden,), jnp.float32, -bound1, bound1)
    w2 = jax.random.uniform(k3, (n_hidden, n_output), jnp.float32, -bound2, bound2)
    b2 = jax.random.uniform(k4, (n_output,), jnp.float32, -bound2, bound2)
    return w1, b1, w2, b2


if __name__ == "__main__":
    # Classification.py uses n_feature=2, n_hidden=10, n_output=2,
    # with x = cat(normal(+2,1,(100,2)), normal(-2,1,(100,2))) -> (200, 2)
    n_feature, n_hidden, n_output = 2, 10, 2
    key = jax.random.PRNGKey(0)
    kx, kp = jax.random.split(key)

    n_data = jnp.ones((100, 2), jnp.float32)
    kx0, kx1 = jax.random.split(kx)
    x0 = 2.0 * n_data + jax.random.normal(kx0, (100, 2), jnp.float32)
    x1 = -2.0 * n_data + jax.random.normal(kx1, (100, 2), jnp.float32)
    x = jnp.concatenate([x0, x1], axis=0).astype(jnp.float32)   # (200, 2)

    w1, b1, w2, b2 = init_params(kp, n_feature, n_hidden, n_output)

    # Pack parameters ONCE (hoisted out of the per-forward path).
    slab, meta = pack_params(w1, b1, w2, b2)
    slab = jax.block_until_ready(slab)

    out = net_forward(x, slab, meta)
    out = jax.block_until_ready(out)

    # Reference check in plain JAX (same math as PyTorch Net.forward).
    ref = jnp.maximum(x @ w1 + b1, 0.0) @ w2 + b2
    assert out.shape == (200, n_output)
    assert jnp.allclose(out, ref, atol=1e-4, rtol=1e-4), float(jnp.abs(out - ref).max())

    print("KERNEL_OK")
</pallas_src>

<mosaic_0001>
module attributes {stable_mosaic.version = 11 : i64} {
  func.func @mlp_kernel(%arg0: i32, %arg1: memref<200x2xf32, #tpu.memory_space<vmem>>, %arg2: memref<144x128xf32, #tpu.memory_space<vmem>>, %arg3: memref<200x128xf32, #tpu.memory_space<vmem>>) attributes {dimension_semantics = [#tpu.dimension_semantics<parallel>], iteration_bounds = array<i64: 1>, scalar_prefetch = 0 : i64, scratch_operands = 0 : i64, tpu.core_type = #tpu.core_type<tc>, window_params = [{transform_indices = @transform_0, window_bounds = array<i64: 200, 2>}, {pipeline_mode = #tpu.pipeline_mode<synchronous>, transform_indices = @transform_1, window_bounds = array<i64: 144, 128>}, {transform_indices = @transform_2, window_bounds = array<i64: 200, 128>}]} {
    %c2 = arith.constant 2 : index
    %c0 = arith.constant 0 : index
    %0 = vector.load %arg2[%c2, %c0] : memref<144x128xf32, #tpu.memory_space<vmem>>, vector<1x128xf32>
    %c0_0 = arith.constant 0 : index
    %c0_1 = arith.constant 0 : index
    %1 = vector.load %arg1[%c0_0, %c0_1] : memref<200x2xf32, #tpu.memory_space<vmem>>, vector<200x1xf32>
    %c0_2 = arith.constant 0 : index
    %c0_3 = arith.constant 0 : index
    %2 = vector.load %arg2[%c0_2, %c0_3] : memref<144x128xf32, #tpu.memory_space<vmem>>, vector<1x128xf32>
    %3 = vector.broadcast %1 : vector<200x1xf32> to vector<200x128xf32>
    %4 = vector.broadcast %2 : vector<1x128xf32> to vector<200x128xf32>
    %5 = arith.mulf %3, %4 : vector<200x128xf32>
    %6 = vector.broadcast %0 : vector<1x128xf32> to vector<200x128xf32>
    %7 = arith.addf %6, %5 : vector<200x128xf32>
    %c0_4 = arith.constant 0 : index
    %c1 = arith.constant 1 : index
    %8 = vector.load %arg1[%c0_4, %c1] : memref<200x2xf32, #tpu.memory_space<vmem>>, vector<200x1xf32>
    %c1_5 = arith.constant 1 : index
    %c0_6 = arith.constant 0 : index
    %9 = vector.load %arg2[%c1_5, %c0_6] : memref<144x128xf32, #tpu.memory_space<vmem>>, vector<1x128xf32>
    %10 = vector.broadcast %8 : vector<200x1xf32> to vector<200x128xf32>
    %11 = vector.broadcast %9 : vector<1x128xf32> to vector<200x128xf32>
    %12 = arith.mulf %10, %11 : vector<200x128xf32>
    %13 = arith.addf %7, %12 : vector<200x128xf32>
    %cst = arith.constant 0.000000e+00 : f32
    %14 = vector.broadcast %cst : f32 to vector<200x128xf32>
    %15 = arith.maximumf %13, %14 : vector<200x128xf32>
    %c8 = arith.constant 8 : index
    %c0_7 = arith.constant 0 : index
    %16 = vector.load %arg2[%c8, %c0_7] : memref<144x128xf32, #tpu.memory_space<vmem>>, vector<128x128xf32>
    %cst_8 = arith.constant dense<0.000000e+00> : vector<200x128xf32>
    %17 = tpu.matmul %15, %16, %cst_8 {dimension_numbers = #tpu.dot_dimension_numbers<[1], [0], [0], [1], [0, 0, 1, 1], [], []>, precision = #tpu.contract_precision<fp32>} : vector<200x128xf32>, vector<128x128xf32>, vector<200x128xf32> -> vector<200x128xf32>
    %c136 = arith.constant 136 : index
    %c0_9 = arith.constant 0 : index
    %18 = vector.load %arg2[%c136, %c0_9] : memref<144x128xf32, #tpu.memory_space<vmem>>, vector<1x128xf32>
    %19 = vector.broadcast %18 : vector<1x128xf32> to vector<200x128xf32>
    %20 = arith.addf %17, %19 : vector<200x128xf32>
    %c0_10 = arith.constant 0 : index
    %c0_11 = arith.constant 0 : index
    %21 = vector.load %arg3[%c0_10, %c0_11] : memref<200x128xf32, #tpu.memory_space<vmem>>, vector<200x128xf32>
    tpu.vector_store %arg3[%c0_10, %c0_11], %20 {strides = array<i32>} : memref<200x128xf32, #tpu.memory_space<vmem>>, vector<200x128xf32>,
    return
  }
  func.func @transform_0(%arg0: i32) -> (i32, i32) {
    %c0_i32 = arith.constant 0 : i32
    %c0_i32_0 = arith.constant 0 : i32
    return %arg0, %c0_i32 : i32, i32
  }
  func.func @transform_1(%arg0: i32) -> (i32, i32) {
    %c0_i32 = arith.constant 0 : i32
    %c0_i32_0 = arith.constant 0 : i32
    %c0_i32_1 = arith.constant 0 : i32
    return %c0_i32, %c0_i32_0 : i32, i32
  }
  func.func @transform_2(%arg0: i32) -> (i32, i32) {
    %c0_i32 = arith.constant 0 : i32
    %c0_i32_0 = arith.constant 0 : i32
    return %arg0, %c0_i32 : i32, i32
  }
}

</mosaic_0001>

<llo_original>
// kernel: _forward_impl.1
$region0: #{_forward_impl.1}
  #allocation0 [shape = 'u32[]', space=smem, size = 0x4, offset = 0x4, fixed_abs, tag = 'smem constant byte address 0x4 - core index']
  #allocation1 [shape = 'u32[144,128]{1,0:T(1,128)}', space=vmem, size = 0x12000, scoped, tag = 'internal scratch']
  %s0 = inlined_call_operand.vmem [shape: f32[200,2], index: 0, kind: input, shape index: {}]
  %s1 = inlined_call_operand.vmem [shape: f32[144,128], index: 1, kind: input, shape index: {}]
  %s2 = inlined_call_operand.vmem [shape: f32[200,128], index: 2, kind: output, shape index: {}]
  %s3 = sld [smem:[#allocation0]]
  $region18: #{_forward_impl.1} parent=0
    _
  %s5 = ssub.s32 1, %s3
  %s6 = scalar_select 0, %s5, %s3
  // Predicated region
  $region2: #{_forward_impl.1} parent=0 // pred_check
    _
  $region3: #{_forward_impl.1} parent=0 // pred_check_branch
    %8 = sbr.rel (0) target = $region5
  $region4: #{_forward_impl.1} parent=0 // pred_region
    _
  $region5: #{_forward_impl.1} parent=0 // pred_fallthru
    _
  // Predicated region
  $region6: #{_forward_impl.1} parent=0 // pred_check
    _
  $region7: #{_forward_impl.1} parent=0 // pred_check_branch
    %10 = sbr.rel (0) target = $region9
  $region8: #{_forward_impl.1} parent=0 // pred_region
    _
  $region9: #{_forward_impl.1} parent=0 // pred_fallthru
    _
  %v11 = vld [vmem:[%s1 + $0x2] sm:$0x1]
  %v12 = vld [vmem:[%s0] sm:$0xff]
  %v13 = vld [vmem:[%s0 + $0x8] sm:$0xff]
  %v14 = vld [vmem:[%s0 + $0x10] sm:$0xff]
  %v15 = vld [vmem:[%s0 + $0x18] sm:$0xff]
  %v16 = vld [vmem:[%s0 + $0x20] sm:$0xff]
  %v17 = vld [vmem:[%s0 + $0x28] sm:$0xff]
  %v18 = vld [vmem:[%s0 + $0x30] sm:$0xff]
  %v19 = vld [vmem:[%s0 + $0x38] sm:$0xff]
  %v20 = vld [vmem:[%s0 + $0x40] sm:$0xff]
  %v21 = vld [vmem:[%s0 + $0x48] sm:$0xff]
  %v22 = vld [vmem:[%s0 + $0x50] sm:$0xff]
  %v23 = vld [vmem:[%s0 + $0x58] sm:$0xff]
  %v24 = vld [vmem:[%s0 + $0x60] sm:$0xff]
  %v25 = vld [vmem:[%s0 + $0x68] sm:$0xff]
  %v26 = vld [vmem:[%s0 + $0x70] sm:$0xff]
  %v27 = vld [vmem:[%s0 + $0x78] sm:$0xff]
  %v28 = vld [vmem:[%s0 + $0x80] sm:$0xff]
  %v29 = vld [vmem:[%s0 + $0x88] sm:$0xff]
  %v30 = vld [vmem:[%s0 + $0x90] sm:$0xff]
  %v31 = vld [vmem:[%s0 + $0x98] sm:$0xff]
  %v32 = vld [vmem:[%s0 + $0xa0] sm:$0xff]
  %v33 = vld [vmem:[%s0 + $0xa8] sm:$0xff]
  %v34 = vld [vmem:[%s0 + $0xb0] sm:$0xff]
  %v35 = vld [vmem:[%s0 + $0xb8] sm:$0xff]
  %v36 = vld [vmem:[%s0 + $0xc0] sm:$0xff]
  %v37 = vld [vmem:[%s1] sm:$0x1]
  %39 = vset.pattern.permute.xlu0 0
  %40 = vperm.xlu0 %39, %v12
  %v41 = vpop.permute.xlu0 %40
  %44 = vset.pattern.permute.xlu0 0
  %45 = vperm.xlu0 %44, %v13
  %v46 = vpop.permute.xlu0 %45
  %49 = vset.pattern.permute.xlu0 0
  %50 = vperm.xlu0 %49, %v14
  %v51 = vpop.permute.xlu0 %50
  %54 = vset.pattern.permute.xlu0 0
  %55 = vperm.xlu0 %54, %v15
  %v56 = vpop.permute.xlu0 %55
  %59 = vset.pattern.permute.xlu0 0
  %60 = vperm.xlu0 %59, %v16
  %v61 = vpop.permute.xlu0 %60
  %64 = vset.pattern.permute.xlu0 0
  %65 = vperm.xlu0 %64, %v17
  %v66 = vpop.permute.xlu0 %65
  %69 = vset.pattern.permute.xlu0 0
  %70 = vperm.xlu0 %69, %v18
  %v71 = vpop.permute.xlu0 %70
  %74 = vset.pattern.permute.xlu0 0
  %75 = vperm.xlu0 %74, %v19
  %v76 = vpop.permute.xlu0 %75
  %79 = vset.pattern.permute.xlu0 0
  %80 = vperm.xlu0 %79, %v20
  %v81 = vpop.permute.xlu0 %80
  %84 = vset.pattern.permute.xlu0 0
  %85 = vperm.xlu0 %84, %v21
  %v86 = vpop.permute.xlu0 %85
  %89 = vset.pattern.permute.xlu0 0
  %90 = vperm.xlu0 %89, %v22
  %v91 = vpop.permute.xlu0 %90
  %94 = vset.pattern.permute.xlu0 0
  %95 = vperm.xlu0 %94, %v23
  %v96 = vpop.permute.xlu0 %95
  %99 = vset.pattern.permute.xlu0 0
  %100 = vperm.xlu0 %99, %v24
  %v101 = vpop.permute.xlu0 %100
  %104 = vset.pattern.permute.xlu0 0
  %105 = vperm.xlu0 %104, %v25
  %v106 = vpop.permute.xlu0 %105
  %109 = vset.pattern.permute.xlu0 0
  %110 = vperm.xlu0 %109, %v26
  %v111 = vpop.permute.xlu0 %110
  %114 = vset.pattern.permute.xlu0 0
  %115 = vperm.xlu0 %114, %v27
  %v116 = vpop.permute.xlu0 %115
  %119 = vset.pattern.permute.xlu0 0
  %120 = vperm.xlu0 %119, %v28
  %v121 = vpop.permute.xlu0 %120
  %124 = vset.pattern.permute.xlu0 0
  %125 = vperm.xlu0 %124, %v29
  %v126 = vpop.permute.xlu0 %125
  %129 = vset.pattern.permute.xlu0 0
  %130 = vperm.xlu0 %129, %v30
  %v131 = vpop.permute.xlu0 %130
  %134 = vset.pattern.permute.xlu0 0
  %135 = vperm.xlu0 %134, %v31
  %v136 = vpop.permute.xlu0 %135
  %139 = vset.pattern.permute.xlu0 0
  %140 = vperm.xlu0 %139, %v32
  %v141 = vpop.permute.xlu0 %140
  %144 = vset.pattern.permute.xlu0 0
  %145 = vperm.xlu0 %144, %v33
  %v146 = vpop.permute.xlu0 %145
  %149 = vset.pattern.permute.xlu0 0
  %150 = vperm.xlu0 %149, %v34
  %v151 = vpop.permute.xlu0 %150
  %154 = vset.pattern.permute.xlu0 0
  %155 = vperm.xlu0 %154, %v35
  %v156 = vpop.permute.xlu0 %155
  %159 = vset.pattern.permute.xlu0 0
  %160 = vperm.xlu0 %159, %v36
  %v161 = vpop.permute.xlu0 %160
  %v163 = vlaneseq
  %v164 = vshrl.u32 %v163, 7
  %v165 = vsub.s32 0, %v164
  %v166 = vrot.slane %v37, %v165
  %v167 = vmul.f32 %v41, %v166
  %v168 = vmul.f32 %v46, %v166
  %v169 = vmul.f32 %v51, %v166
  %v170 = vmul.f32 %v56, %v166
  %v171 = vmul.f32 %v61, %v166
  %v172 = vmul.f32 %v66, %v166
  %v173 = vmul.f32 %v71, %v166
  %v174 = vmul.f32 %v76, %v166
  %v175 = vmul.f32 %v81, %v166
  %v176 = vmul.f32 %v86, %v166
  %v177 = vmul.f32 %v91, %v166
  %v178 = vmul.f32 %v96, %v166
  %v179 = vmul.f32 %v101, %v166
  %v180 = vmul.f32 %v106, %v166
  %v181 = vmul.f32 %v111, %v166
  %v182 = vmul.f32 %v116, %v166
  %v183 = vmul.f32 %v121, %v166
  %v184 = vmul.f32 %v126, %v166
  %v185 = vmul.f32 %v131, %v166
  %v186 = vmul.f32 %v136, %v166
  %v187 = vmul.f32 %v141, %v166
  %v188 = vmul.f32 %v146, %v166
  %v189 = vmul.f32 %v151, %v166
  %v190 = vmul.f32 %v156, %v166
  %v191 = vmul.f32 %v161, %v166
  %v192 = vlaneseq
  %v193 = vshrl.u32 %v192, 7
  %v194 = vsub.s32 0, %v193
  %v195 = vrot.slane %v11, %v194
  %v196 = vadd.f32 %v195, %v167
  %v197 = vadd.f32 %v195, %v168
  %v198 = vadd.f32 %v195, %v169
  %v199 = vadd.f32 %v195, %v170
  %v200 = vadd.f32 %v195, %v171
  %v201 = vadd.f32 %v195, %v172
  %v202 = vadd.f32 %v195, %v173
  %v203 = vadd.f32 %v195, %v174
  %v204 = vadd.f32 %v195, %v175
  %v205 = vadd.f32 %v195, %v176
  %v206 = vadd.f32 %v195, %v177
  %v207 = vadd.f32 %v195, %v178
  %v208 = vadd.f32 %v195, %v179
  %v209 = vadd.f32 %v195, %v180
  %v210 = vadd.f32 %v195, %v181
  %v211 = vadd.f32 %v195, %v182
  %v212 = vadd.f32 %v195, %v183
  %v213 = vadd.f32 %v195, %v184
  %v214 = vadd.f32 %v195, %v185
  %v215 = vadd.f32 %v195, %v186
  %v216 = vadd.f32 %v195, %v187
  %v217 = vadd.f32 %v195, %v188
  %v218 = vadd.f32 %v195, %v189
  %v219 = vadd.f32 %v195, %v190
  %v220 = vadd.f32 %v195, %v191
  %v221 = vld [vmem:[%s1 + $0x1] sm:$0x1]
  %222 = vset.pattern.permute.xlu0 1
  %223 = vperm.xlu0 %222, %v12
  %v224 = vpop.permute.xlu0 %223
  %226 = vset.pattern.permute.xlu0 1
  %227 = vperm.xlu0 %226, %v13
  %v228 = vpop.permute.xlu0 %227
  %230 = vset.pattern.permute.xlu0 1
  %231 = vperm.xlu0 %230, %v14
  %v232 = vpop.permute.xlu0 %231
  %234 = vset.pattern.permute.xlu0 1
  %235 = vperm.xlu0 %234, %v15
  %v236 = vpop.permute.xlu0 %235
  %238 = vset.pattern.permute.xlu0 1
  %239 = vperm.xlu0 %238, %v16
  %v240 = vpop.permute.xlu0 %239
  %242 = vset.pattern.permute.xlu0 1
  %243 = vperm.xlu0 %242, %v17
  %v244 = vpop.permute.xlu0 %243
  %246 = vset.pattern.permute.xlu0 1
  %247 = vperm.xlu0 %246, %v18
  %v248 = vpop.permute.xlu0 %247
  %250 = vset.pattern.permute.xlu0 1
  %251 = vperm.xlu0 %250, %v19
  %v252 = vpop.permute.xlu0 %251
  %254 = vset.pattern.permute.xlu0 1
  %255 = vperm.xlu0 %254, %v20
  %v256 = vpop.permute.xlu0 %255
  %258 = vset.pattern.permute.xlu0 1
  %259 = vperm.xlu0 %258, %v21
  %v260 = vpop.permute.xlu0 %259
  %262 = vset.pattern.permute.xlu0 1
  %263 = vperm.xlu0 %262, %v22
  %v264 = vpop.permute.xlu0 %263
  %266 = vset.pattern.permute.xlu0 1
  %267 = vperm.xlu0 %266, %v23
  %v268 = vpop.permute.xlu0 %267
  %270 = vset.pattern.permute.xlu0 1
  %271 = vperm.xlu0 %270, %v24
  %v272 = vpop.permute.xlu0 %271
  %274 = vset.pattern.permute.xlu0 1
  %275 = vperm.xlu0 %274, %v25
  %v276 = vpop.permute.xlu0 %275
  %278 = vset.pattern.permute.xlu0 1
  %279 = vperm.xlu0 %278, %v26
  %v280 = vpop.permute.xlu0 %279
  %282 = vset.pattern.permute.xlu0 1
  %283 = vperm.xlu0 %282, %v27
  %v284 = vpop.permute.xlu0 %283
  %286 = vset.pattern.permute.xlu0 1
  %287 = vperm.xlu0 %286, %v28
  %v288 = vpop.permute.xlu0 %287
  %290 = vset.pattern.permute.xlu0 1
  %291 = vperm.xlu0 %290, %v29
  %v292 = vpop.permute.xlu0 %291
  %294 = vset.pattern.permute.xlu0 1
  %295 = vperm.xlu0 %294, %v30
  %v296 = vpop.permute.xlu0 %295
  %298 = vset.pattern.permute.xlu0 1
  %299 = vperm.xlu0 %298, %v31
  %v300 = vpop.permute.xlu0 %299
  %302 = vset.pattern.permute.xlu0 1
  %303 = vperm.xlu0 %302, %v32
  %v304 = vpop.permute.xlu0 %303
  %306 = vset.pattern.permute.xlu0 1
  %307 = vperm.xlu0 %306, %v33
  %v308 = vpop.permute.xlu0 %307
  %310 = vset.pattern.permute.xlu0 1
  %311 = vperm.xlu0 %310, %v34
  %v312 = vpop.permute.xlu0 %311
  %314 = vset.pattern.permute.xlu0 1
  %315 = vperm.xlu0 %314, %v35
  %v316 = vpop.permute.xlu0 %315
  %318 = vset.pattern.permute.xlu0 1
  %319 = vperm.xlu0 %318, %v36
  %v320 = vpop.permute.xlu0 %319
  %v322 = vlaneseq
  %v323 = vshrl.u32 %v322, 7
  %v324 = vsub.s32 0, %v323
  %v325 = vrot.slane %v221, %v324
  %v326 = vmul.f32 %v224, %v325
  %v327 = vmul.f32 %v228, %v325
  %v328 = vmul.f32 %v232, %v325
  %v329 = vmul.f32 %v236, %v325
  %v330 = vmul.f32 %v240, %v325
  %v331 = vmul.f32 %v244, %v325
  %v332 = vmul.f32 %v248, %v325
  %v333 = vmul.f32 %v252, %v325
  %v334 = vmul.f32 %v256, %v325
  %v335 = vmul.f32 %v260, %v325
  %v336 = vmul.f32 %v264, %v325
  %v337 = vmul.f32 %v268, %v325
  %v338 = vmul.f32 %v272, %v325
  %v339 = vmul.f32 %v276, %v325
  %v340 = vmul.f32 %v280, %v325
  %v341 = vmul.f32 %v284, %v325
  %v342 = vmul.f32 %v288, %v325
  %v343 = vmul.f32 %v292, %v325
  %v344 = vmul.f32 %v296, %v325
  %v345 = vmul.f32 %v300, %v325
  %v346 = vmul.f32 %v304, %v325
  %v347 = vmul.f32 %v308, %v325
  %v348 = vmul.f32 %v312, %v325
  %v349 = vmul.f32 %v316, %v325
  %v350 = vmul.f32 %v320, %v325
  %v351 = vadd.f32 %v196, %v326
  %v352 = vadd.f32 %v197, %v327
  %v353 = vadd.f32 %v198, %v328
  %v354 = vadd.f32 %v199, %v329
  %v355 = vadd.f32 %v200, %v330
  %v356 = vadd.f32 %v201, %v331
  %v357 = vadd.f32 %v202, %v332
  %v358 = vadd.f32 %v203, %v333
  %v359 = vadd.f32 %v204, %v334
  %v360 = vadd.f32 %v205, %v335
  %v361 = vadd.f32 %v206, %v336
  %v362 = vadd.f32 %v207, %v337
  %v363 = vadd.f32 %v208, %v338
  %v364 = vadd.f32 %v209, %v339
  %v365 = vadd.f32 %v210, %v340
  %v366 = vadd.f32 %v211, %v341
  %v367 = vadd.f32 %v212, %v342
  %v368 = vadd.f32 %v213, %v343
  %v369 = vadd.f32 %v214, %v344
  %v370 = vadd.f32 %v215, %v345
  %v371 = vadd.f32 %v216, %v346
  %v372 = vadd.f32 %v217, %v347
  %v373 = vadd.f32 %v218, %v348
  %v374 = vadd.f32 %v219, %v349
  %v375 = vadd.f32 %v220, %v350
  %v376 = vmax.f32 %v351, 0.0
  %v377 = vmax.f32 %v352, 0.0
  %v378 = vmax.f32 %v353, 0.0
  %v379 = vmax.f32 %v354, 0.0
  %v380 = vmax.f32 %v355, 0.0
  %v381 = vmax.f32 %v356, 0.0
  %v382 = vmax.f32 %v357, 0.0
  %v383 = vmax.f32 %v358, 0.0
  %v384 = vmax.f32 %v359, 0.0
  %v385 = vmax.f32 %v360, 0.0
  %v386 = vmax.f32 %v361, 0.0
  %v387 = vmax.f32 %v362, 0.0
  %v388 = vmax.f32 %v363, 0.0
  %v389 = vmax.f32 %v364, 0.0
  %v390 = vmax.f32 %v365, 0.0
  %v391 = vmax.f32 %v366, 0.0
  %v392 = vmax.f32 %v367, 0.0
  %v393 = vmax.f32 %v368, 0.0
  %v394 = vmax.f32 %v369, 0.0
  %v395 = vmax.f32 %v370, 0.0
  %v396 = vmax.f32 %v371, 0.0
  %v397 = vmax.f32 %v372, 0.0
  %v398 = vmax.f32 %v373, 0.0
  %v399 = vmax.f32 %v374, 0.0
  %v400 = vmax.f32 %v375, 0.0
  %v401 = vld [vmem:[%s1 + $0x8] sm:$0xff]
  %v402 = vld [vmem:[%s1 + $0x10] sm:$0xff]
  %v403 = vld [vmem:[%s1 + $0x18] sm:$0xff]
  %v404 = vld [vmem:[%s1 + $0x20] sm:$0xff]
  %v405 = vld [vmem:[%s1 + $0x28] sm:$0xff]
  %v406 = vld [vmem:[%s1 + $0x30] sm:$0xff]
  %v407 = vld [vmem:[%s1 + $0x38] sm:$0xff]
  %v408 = vld [vmem:[%s1 + $0x40] sm:$0xff]
  %v409 = vld [vmem:[%s1 + $0x48] sm:$0xff]
  %v410 = vld [vmem:[%s1 + $0x50] sm:$0xff]
  %v411 = vld [vmem:[%s1 + $0x58] sm:$0xff]
  %v412 = vld [vmem:[%s1 + $0x60] sm:$0xff]
  %v413 = vld [vmem:[%s1 + $0x68] sm:$0xff]
  %v414 = vld [vmem:[%s1 + $0x70] sm:$0xff]
  %v415 = vld [vmem:[%s1 + $0x78] sm:$0xff]
  %v416 = vld [vmem:[%s1 + $0x80] sm:$0xff]
  %v417 = vld [vmem:[%s1 + $0x88] sm:$0x1]
  %v418 = vlaneseq
  %v419 = vshrl.u32 %v418, 7
  %v420 = vsub.s32 0, %v419
  %v421 = vrot.slane %v417, %v420
  %422 = vmatprep.subr.mxu0 0.0
  %v423 = vand.u32 %v401, 4294901760
  %424 = vmatpush1.msra.mxu0 %v423
  %425 = vmatprep.subr.mxu0 0.0
  %v426 = vand.u32 %v402, 4294901760
  %427 = vmatpush1.msra.mxu0 %v426
  %428 = vmatprep.subr.mxu0 0.0
  %v429 = vand.u32 %v403, 4294901760
  %430 = vmatpush1.msra.mxu0 %v429
  %431 = vmatprep.subr.mxu0 0.0
  %v432 = vand.u32 %v404, 4294901760
  %433 = vmatpush1.msra.mxu0 %v432
  %434 = vmatprep.subr.mxu0 0.0
  %v435 = vand.u32 %v405, 4294901760
  %436 = vmatpush1.msra.mxu0 %v435
  %437 = vmatprep.subr.mxu0 0.0
  %v438 = vand.u32 %v406, 4294901760
  %439 = vmatpush1.msra.mxu0 %v438
  %440 = vmatprep.subr.mxu0 0.0
  %v441 = vand.u32 %v407, 4294901760
  %442 = vmatpush1.msra.mxu0 %v441
  %443 = vmatprep.subr.mxu0 0.0
  %v444 = vand.u32 %v408, 4294901760
  %445 = vmatpush1.msra.mxu0 %v444
  %446 = vmatprep.subr.mxu0 0.0
  %v447 = vand.u32 %v409, 4294901760
  %448 = vmatpush1.msra.mxu0 %v447
  %449 = vmatprep.subr.mxu0 0.0
  %v450 = vand.u32 %v410, 4294901760
  %451 = vmatpush1.msra.mxu0 %v450
  %452 = vmatprep.subr.mxu0 0.0
  %v453 = vand.u32 %v411, 4294901760
  %454 = vmatpush1.msra.mxu0 %v453
  %455 = vmatprep.subr.mxu0 0.0
  %v456 = vand.u32 %v412, 4294901760
  %457 = vmatpush1.msra.mxu0 %v456
  %458 = vmatprep.subr.mxu0 0.0
  %v459 = vand.u32 %v413, 4294901760
  %460 = vmatpush1.msra.mxu0 %v459
  %461 = vmatprep.subr.mxu0 0.0
  %v462 = vand.u32 %v414, 4294901760
  %463 = vmatpush1.msra.mxu0 %v462
  %464 = vmatprep.subr.mxu0 0.0
  %v465 = vand.u32 %v415, 4294901760
  %466 = vmatpush1.msra.mxu0 %v465
  %467 = vmatprep.subr.mxu0 0.0
  %v468 = vand.u32 %v416, 4294901760
  %469 = vmatpush1.msra.mxu0 %v468
  %470 = vmatprep.subr.mxu0 0.0
  %471 = vmatpush1.msra.mxu0 0.0
  %472 = vmatprep.subr.mxu0 0.0
  %473 = vmatpush1.msra.mxu0 0.0
  %474 = vmatprep.subr.mxu0 0.0
  %475 = vmatpush1.msra.mxu0 0.0
  %476 = vmatprep.subr.mxu0 0.0
  %477 = vmatpush1.msra.mxu0 0.0
  %478 = vmatprep.subr.mxu0 0.0
  %479 = vmatpush1.msra.mxu0 0.0
  %480 = vmatprep.subr.mxu0 0.0
  %481 = vmatpush1.msra.mxu0 0.0
  %482 = vmatprep.subr.mxu0 0.0
  %483 = vmatpush1.msra.mxu0 0.0
  %484 = vmatprep.subr.mxu0 0.0
  %485 = vmatpush1.msra.mxu0 0.0
  %486 = vmatprep.subr.mxu0 0.0
  %487 = vmatpush1.msra.mxu0 0.0
  %488 = vmatprep.subr.mxu0 0.0
  %489 = vmatpush1.msra.mxu0 0.0
  %490 = vmatprep.subr.mxu0 0.0
  %491 = vmatpush1.msra.mxu0 0.0
  %492 = vmatprep.subr.mxu0 0.0
  %493 = vmatpush1.msra.mxu0 0.0
  %494 = vmatprep.subr.mxu0 0.0
  %495 = vmatpush1.msra.mxu0 0.0
  %496 = vmatprep.subr.mxu0 0.0
  %497 = vmatpush1.msra.mxu0 0.0
  %498 = vmatprep.subr.mxu0 0.0
  %499 = vmatpush1.msra.mxu0 0.0
  %500 = vmatprep.subr.mxu0 0.0
  %501 = vmatpush1.msra.mxu0 0.0
  %502 = vmatprep.mubr.f32.mxu0 0.0
  %v503 = vand.u32 %v376, 4294901760
  %v504 = vsub.f32 %v376, %v503
  %v505 = vand.u32 %v504, 4294901760
  %v506 = vsub.f32 %v504, %v505
  %v507 = vand.u32 %v506, 4294901760
  %508 = vmatmul.mubr.f32.gmra.mrb[0].mxu0 %v507
  %v509 = vpop.f32.mrb[0].mxu0
  %v510 = vadd.f32 %v421, %v509
  %v511 = vpop.f32.mrb[0].mxu0
  %512 = vmatprep.mubr.f32.mxu0 0.0
  %v513 = vand.u32 %v377, 4294901760
  %v514 = vsub.f32 %v377, %v513
  %v515 = vand.u32 %v514, 4294901760
  %v516 = vsub.f32 %v514, %v515
  %v517 = vand.u32 %v516, 4294901760
  %518 = vmatmul.mubr.f32.gmra.mrb[0].mxu0 %v517
  %v519 = vpop.f32.mrb[0].mxu0
  %v520 = vadd.f32 %v421, %v519
  %v521 = vpop.f32.mrb[0].mxu0
  %522 = vmatprep.mubr.f32.mxu0 0.0
  %v523 = vand.u32 %v378, 4294901760
  %v524 = vsub.f32 %v378, %v523
  %v525 = vand.u32 %v524, 4294901760
  %v526 = vsub.f32 %v524, %v525
  %v527 = vand.u32 %v526, 4294901760
  %528 = vmatmul.mubr.f32.gmra.mrb[0].mxu0 %v527
  %v529 = vpop.f32.mrb[0].mxu0
  %v530 = vadd.f32 %v421, %v529
  %v531 = vpop.f32.mrb[0].mxu0
  %532 = vmatprep.mubr.f32.mxu0 0.0
  %v533 = vand.u32 %v379, 4294901760
  %v534 = vsub.f32 %v379, %v533
  %v535 = vand.u32 %v534, 4294901760
  %v536 = vsub.f32 %v534, %v535
  %v537 = vand.u32 %v536, 4294901760
  %538 = vmatmul.mubr.f32.gmra.mrb[0].mxu0 %v537
  %v539 = vpop.f32.mrb[0].mxu0
  %v540 = vadd.f32 %v421, %v539
  %v541 = vpop.f32.mrb[0].mxu0
  %542 = vmatprep.mubr.f32.mxu0 0.0
  %v543 = vand.u32 %v380, 4294901760
  %v544 = vsub.f32 %v380, %v543
  %v545 = vand.u32 %v544, 4294901760
  %v546 = vsub.f32 %v544, %v545
  %v547 = vand.u32 %v546, 4294901760
  %548 = vmatmul.mubr.f32.gmra.mrb[0].mxu0 %v547
  %v549 = vpop.f32.mrb[0].mxu0
  %v550 = vadd.f32 %v421, %v549
  %v551 = vpop.f32.mrb[0].mxu0
  %552 = vmatprep.mubr.f32.mxu0 0.0
  %v553 = vand.u32 %v381, 4294901760
  %v554 = vsub.f32 %v381, %v553
  %v555 = vand.u32 %v554, 4294901760
  %v556 = vsub.f32 %v554, %v555
  %v557 = vand.u32 %v556, 4294901760
  %558 = vmatmul.mubr.f32.gmra.mrb[0].mxu0 %v557
  %v559 = vpop.f32.mrb[0].mxu0
  %v560 = vadd.f32 %v421, %v559
  %v561 = vpop.f32.mrb[0].mxu0
  %562 = vmatprep.mubr.f32.mxu0 0.0
  %v563 = vand.u32 %v382, 4294901760
  %v564 = vsub.f32 %v382, %v563
  %v565 = vand.u32 %v564, 4294901760
  %v566 = vsub.f32 %v564, %v565
  %v567 = vand.u32 %v566, 4294901760
  %568 = vmatmul.mubr.f32.gmra.mrb[0].mxu0 %v567
  %v569 = vpop.f32.mrb[0].mxu0
  %v570 = vadd.f32 %v421, %v569
  %v571 = vpop.f32.mrb[0].mxu0
  %572 = vmatprep.mubr.f32.mxu0 0.0
  %v573 = vand.u32 %v383, 4294901760
  %v574 = vsub.f32 %v383, %v573
  %v575 = vand.u32 %v574, 4294901760
  %v576 = vsub.f32 %v574, %v575
  %v577 = vand.u32 %v576, 4294901760
  %578 = vmatmul.mubr.f32.gmra.mrb[0].mxu0 %v577
  %v579 = vpop.f32.mrb[0].mxu0
  %v580 = vadd.f32 %v421, %v579
  %v581 = vpop.f32.mrb[0].mxu0
  %582 = vmatprep.mubr.f32.mxu0 0.0
  %v583 = vand.u32 %v384, 4294901760
  %v584 = vsub.f32 %v384, %v583
  %v585 = vand.u32 %v584, 4294901760
  %v586 = vsub.f32 %v584, %v585
  %v587 = vand.u32 %v586, 4294901760
  %588 = vmatmul.mubr.f32.gmra.mrb[0].mxu0 %v587
  %v589 = vpop.f32.mrb[0].mxu0
  %v590 = vadd.f32 %v421, %v589
  %v591 = vpop.f32.mrb[0].mxu0
  %592 = vmatprep.mubr.f32.mxu0 0.0
  %v593 = vand.u32 %v385, 4294901760
  %v594 = vsub.f32 %v385, %v593
  %v595 = vand.u32 %v594, 4294901760
  %v596 = vsub.f32 %v594, %v595
  %v597 = vand.u32 %v596, 4294901760
  %598 = vmatmul.mubr.f32.gmra.mrb[0].mxu0 %v597
  %v599 = vpop.f32.mrb[0].mxu0
  %v600 = vadd.f32 %v421, %v599
  %v601 = vpop.f32.mrb[0].mxu0
  %602 = vmatprep.mubr.f32.mxu0 0.0
  %v603 = vand.u32 %v386, 4294901760
  %v604 = vsub.f32 %v386, %v603
  %v605 = vand.u32 %v604, 4294901760
  %v606 = vsub.f32 %v604, %v605
  %v607 = vand.u32 %v606, 4294901760
  %608 = vmatmul.mubr.f32.gmra.mrb[0].mxu0 %v607
  %v609 = vpop.f32.mrb[0].mxu0
  %v610 = vadd.f32 %v421, %v609
  %v611 = vpop.f32.mrb[0].mxu0
  %612 = vmatprep.mubr.f32.mxu0 0.0
  %v613 = vand.u32 %v387, 4294901760
  %v614 = vsub.f32 %v387, %v613
  %v615 = vand.u32 %v614, 4294901760
  %v616 = vsub.f32 %v614, %v615
  %v617 = vand.u32 %v616, 4294901760
  %618 = vmatmul.mubr.f32.gmra.mrb[0].mxu0 %v617
  %v619 = vpop.f32.mrb[0].mxu0
  %v620 = vadd.f32 %v421, %v619
  %v621 = vpop.f32.mrb[0].mxu0
  %622 = vmatprep.mubr.f32.mxu0 0.0
  %v623 = vand.u32 %v388, 4294901760
  %v624 = vsub.f32 %v388, %v623
  %v625 = vand.u32 %v624, 4294901760
  %v626 = vsub.f32 %v624, %v625
  %v627 = vand.u32 %v626, 4294901760
  %628 = vmatmul.mubr.f32.gmra.mrb[0].mxu0 %v627
  %v629 = vpop.f32.mrb[0].mxu0
  %v630 = vadd.f32 %v421, %v629
  %v631 = vpop.f32.mrb[0].mxu0
  %632 = vmatprep.mubr.f32.mxu0 0.0
  %v633 = vand.u32 %v389, 4294901760
  %v634 = vsub.f32 %v389, %v633
  %v635 = vand.u32 %v634, 4294901760
  %v636 = vsub.f32 %v634, %v635
  %v637 = vand.u32 %v636, 4294901760
  %638 = vmatmul.mubr.f32.gmra.mrb[0].mxu0 %v637
  %v639 = vpop.f32.mrb[0].mxu0
  %v640 = vadd.f32 %v421, %v639
  %v641 = vpop.f32.mrb[0].mxu0
  %642 = vmatprep.mubr.f32.mxu0 0.0
  %v643 = vand.u32 %v390, 4294901760
  %v644 = vsub.f32 %v390, %v643
  %v645 = vand.u32 %v644, 4294901760
  %v646 = vsub.f32 %v644, %v645
  %v647 = vand.u32 %v646, 4294901760
  %648 = vmatmul.mubr.f32.gmra.mrb[0].mxu0 %v647
  %v649 = vpop.f32.mrb[0].mxu0
  %v650 = vadd.f32 %v421, %v649
  %v651 = vpop.f32.mrb[0].mxu0
  %652 = vmatprep.mubr.f32.mxu0 0.0
  %v653 = vand.u32 %v391, 4294901760
  %v654 = vsub.f32 %v391, %v653
  %v655 = vand.u32 %v654, 4294901760
  %v656 = vsub.f32 %v654, %v655
  %v657 = vand.u32 %v656, 4294901760
  %658 = vmatmul.mubr.f32.gmra.mrb[0].mxu0 %v657
  %v659 = vpop.f32.mrb[0].mxu0
  %v660 = vadd.f32 %v421, %v659
  %v661 = vpop.f32.mrb[0].mxu0
  %662 = vmatprep.mubr.f32.mxu0 0.0
  %v663 = vand.u32 %v392, 4294901760
  %v664 = vsub.f32 %v392, %v663
  %v665 = vand.u32 %v664, 4294901760
  %v666 = vsub.f32 %v664, %v665
  %v667 = vand.u32 %v666, 4294901760
  %668 = vmatmul.mubr.f32.gmra.mrb[0].mxu0 %v667
  %v669 = vpop.f32.mrb[0].mxu0
  %v670 = vadd.f32 %v421, %v669
  %v671 = vpop.f32.mrb[0].mxu0
  %672 = vmatprep.mubr.f32.mxu0 0.0
  %v673 = vand.u32 %v393, 4294901760
  %v674 = vsub.f32 %v393, %v673
  %v675 = vand.u32 %v674, 4294901760
  %v676 = vsub.f32 %v674, %v675
  %v677 = vand.u32 %v676, 4294901760
  %678 = vmatmul.mubr.f32.gmra.mrb[0].mxu0 %v677
  %v679 = vpop.f32.mrb[0].mxu0
  %v680 = vadd.f32 %v421, %v679
  %v681 = vpop.f32.mrb[0].mxu0
  %682 = vmatprep.mubr.f32.mxu0 0.0
  %v683 = vand.u32 %v394, 4294901760
  %v684 = vsub.f32 %v394, %v683
  %v685 = vand.u32 %v684, 4294901760
  %v686 = vsub.f32 %v684, %v685
  %v687 = vand.u32 %v686, 4294901760
  %688 = vmatmul.mubr.f32.gmra.mrb[0].mxu0 %v687
  %v689 = vpop.f32.mrb[0].mxu0
  %v690 = vadd.f32 %v421, %v689
  %v691 = vpop.f32.mrb[0].mxu0
  %692 = vmatprep.mubr.f32.mxu0 0.0
  %v693 = vand.u32 %v395, 4294901760
  %v694 = vsub.f32 %v395, %v693
  %v695 = vand.u32 %v694, 4294901760
  %v696 = vsub.f32 %v694, %v695
  %v697 = vand.u32 %v696, 4294901760
  %698 = vmatmul.mubr.f32.gmra.mrb[0].mxu0 %v697
  %v699 = vpop.f32.mrb[0].mxu0
  %v700 = vadd.f32 %v421, %v699
  %v701 = vpop.f32.mrb[0].mxu0
  %702 = vmatprep.mubr.f32.mxu0 0.0
  %v703 = vand.u32 %v396, 4294901760
  %v704 = vsub.f32 %v396, %v703
  %v705 = vand.u32 %v704, 4294901760
  %v706 = vsub.f32 %v704, %v705
  %v707 = vand.u32 %v706, 4294901760
  %708 = vmatmul.mubr.f32.gmra.mrb[0].mxu0 %v707
  %v709 = vpop.f32.mrb[0].mxu0
  %v710 = vadd.f32 %v421, %v709
  %v711 = vpop.f32.mrb[0].mxu0
  %712 = vmatprep.mubr.f32.mxu0 0.0
  %v713 = vand.u32 %v397, 4294901760
  %v714 = vsub.f32 %v397, %v713
  %v715 = vand.u32 %v714, 4294901760
  %v716 = vsub.f32 %v714, %v715
  %v717 = vand.u32 %v716, 4294901760
  %718 = vmatmul.mubr.f32.gmra.mrb[0].mxu0 %v717
  %v719 = vpop.f32.mrb[0].mxu0
  %v720 = vadd.f32 %v421, %v719
  %v721 = vpop.f32.mrb[0].mxu0
  %722 = vmatprep.mubr.f32.mxu0 0.0
  %v723 = vand.u32 %v398, 4294901760
  %v724 = vsub.f32 %v398, %v723
  %v725 = vand.u32 %v724, 4294901760
  %v726 = vsub.f32 %v724, %v725
  %v727 = vand.u32 %v726, 4294901760
  %728 = vmatmul.mubr.f32.gmra.mrb[0].mxu0 %v727
  %v729 = vpop.f32.mrb[0].mxu0
  %v730 = vadd.f32 %v421, %v729
  %v731 = vpop.f32.mrb[0].mxu0
  %732 = vmatprep.mubr.f32.mxu0 0.0
  %v733 = vand.u32 %v399, 4294901760
  %v734 = vsub.f32 %v399, %v733
  %v735 = vand.u32 %v734, 4294901760
  %v736 = vsub.f32 %v734, %v735
  %v737 = vand.u32 %v736, 4294901760
  %738 = vmatmul.mubr.f32.gmra.mrb[0].mxu0 %v737
  %v739 = vpop.f32.mrb[0].mxu0
  %v740 = vadd.f32 %v421, %v739
  %v741 = vpop.f32.mrb[0].mxu0
  %742 = vmatprep.mubr.f32.mxu0 0.0
  %v743 = vand.u32 %v400, 4294901760
  %v744 = vsub.f32 %v400, %v743
  %v745 = vand.u32 %v744, 4294901760
  %v746 = vsub.f32 %v744, %v745
  %v747 = vand.u32 %v746, 4294901760
  %748 = vmatmul.mubr.f32.gmra.mrb[0].mxu0 %v747
  %v749 = vpop.f32.mrb[0].mxu0
  %v750 = vadd.f32 %v421, %v749
  %v751 = vpop.f32.mrb[0].mxu0
  %752 = vdwg.mxu0
  %753 = vmatprep.subr.mxu0 0.0
  %v754 = vand.u32 %v401, 4294901760
  %v755 = vsub.f32 %v401, %v754
  %v756 = vand.u32 %v755, 4294901760
  %v757 = vsub.f32 %v755, %v756
  %v758 = vand.u32 %v757, 4294901760
  %759 = vmatpush1.msra.mxu0 %v758
  %760 = vmatprep.subr.mxu0 0.0
  %v761 = vand.u32 %v402, 4294901760
  %v762 = vsub.f32 %v402, %v761
  %v763 = vand.u32 %v762, 4294901760
  %v764 = vsub.f32 %v762, %v763
  %v765 = vand.u32 %v764, 4294901760
  %766 = vmatpush1.msra.mxu0 %v765
  %767 = vmatprep.subr.mxu0 0.0
  %v768 = vand.u32 %v403, 4294901760
  %v769 = vsub.f32 %v403, %v768
  %v770 = vand.u32 %v769, 4294901760
  %v771 = vsub.f32 %v769, %v770
  %v772 = vand.u32 %v771, 4294901760
  %773 = vmatpush1.msra.mxu0 %v772
  %774 = vmatprep.subr.mxu0 0.0
  %v775 = vand.u32 %v404, 4294901760
  %v776 = vsub.f32 %v404, %v775
  %v777 = vand.u32 %v776, 4294901760
  %v778 = vsub.f32 %v776, %v777
  %v779 = vand.u32 %v778, 4294901760
  %780 = vmatpush1.msra.mxu0 %v779
  %781 = vmatprep.subr.mxu0 0.0
  %v782 = vand.u32 %v405, 4294901760
  %v783 = vsub.f32 %v405, %v782
  %v784 = vand.u32 %v783, 4294901760
  %v785 = vsub.f32 %v783, %v784
  %v786 = vand.u32 %v785, 4294901760
  %787 = vmatpush1.msra.mxu0 %v786
  %788 = vmatprep.subr.mxu0 0.0
  %v789 = vand.u32 %v406, 4294901760
  %v790 = vsub.f32 %v406, %v789
  %v791 = vand.u32 %v790, 4294901760
  %v792 = vsub.f32 %v790, %v791
  %v793 = vand.u32 %v792, 4294901760
  %794 = vmatpush1.msra.mxu0 %v793
  %795 = vmatprep.subr.mxu0 0.0
  %v796 = vand.u32 %v407, 4294901760
  %v797 = vsub.f32 %v407, %v796
  %v798 = vand.u32 %v797, 4294901760
  %v799 = vsub.f32 %v797, %v798
  %v800 = vand.u32 %v799, 4294901760
  %801 = vmatpush1.msra.mxu0 %v800
  %802 = vmatprep.subr.mxu0 0.0
  %v803 = vand.u32 %v408, 4294901760
  %v804 = vsub.f32 %v408, %v803
  %v805 = vand.u32 %v804, 4294901760
  %v806 = vsub.f32 %v804, %v805
  %v807 = vand.u32 %v806, 4294901760
  %808 = vmatpush1.msra.mxu0 %v807
  %809 = vmatprep.subr.mxu0 0.0
  %v810 = vand.u32 %v409, 4294901760
  %v811 = vsub.f32 %v409, %v810
  %v812 = vand.u32 %v811, 4294901760
  %v813 = vsub.f32 %v811, %v812
  %v814 = vand.u32 %v813, 4294901760
  %815 = vmatpush1.msra.mxu0 %v814
  %816 = vmatprep.subr.mxu0 0.0
  %v817 = vand.u32 %v410, 4294901760
  %v818 = vsub.f32 %v410, %v817
  %v819 = vand.u32 %v818, 4294901760
  %v820 = vsub.f32 %v818, %v819
  %v821 = vand.u32 %v820, 4294901760
  %822 = vmatpush1.msra.mxu0 %v821
  %823 = vmatprep.subr.mxu0 0.0
  %v824 = vand.u32 %v411, 4294901760
  %v825 = vsub.f32 %v411, %v824
  %v826 = vand.u32 %v825, 4294901760
  %v827 = vsub.f32 %v825, %v826
  %v828 = vand.u32 %v827, 4294901760
  %829 = vmatpush1.msra.mxu0 %v828
  %830 = vmatprep.subr.mxu0 0.0
  %v831 = vand.u32 %v412, 4294901760
  %v832 = vsub.f32 %v412, %v831
  %v833 = vand.u32 %v832, 4294901760
  %v834 = vsub.f32 %v832, %v833
  %v835 = vand.u32 %v834, 4294901760
  %836 = vmatpush1.msra.mxu0 %v835
  %837 = vmatprep.subr.mxu0 0.0
  %v838 = vand.u32 %v413, 4294901760
  %v839 = vsub.f32 %v413, %v838
  %v840 = vand.u32 %v839, 4294901760
  %v841 = vsub.f32 %v839, %v840
  %v842 = vand.u32 %v841, 4294901760
  %843 = vmatpush1.msra.mxu0 %v842
  %844 = vmatprep.subr.mxu0 0.0
  %v845 = vand.u32 %v414, 4294901760
  %v846 = vsub.f32 %v414, %v845
  %v847 = vand.u32 %v846, 4294901760
  %v848 = vsub.f32 %v846, %v847
  %v849 = vand.u32 %v848, 4294901760
  %850 = vmatpush1.msra.mxu0 %v849
  %851 = vmatprep.subr.mxu0 0.0
  %v852 = vand.u32 %v415, 4294901760
  %v853 = vsub.f32 %v415, %v852
  %v854 = vand.u32 %v853, 4294901760
  %v855 = vsub.f32 %v853, %v854
  %v856 = vand.u32 %v855, 4294901760
  %857 = vmatpush1.msra.mxu0 %v856
  %858 = vmatprep.subr.mxu0 0.0
  %v859 = vand.u32 %v416, 4294901760
  %v860 = vsub.f32 %v416, %v859
  %v861 = vand.u32 %v860, 4294901760
  %v862 = vsub.f32 %v860, %v861
  %v863 = vand.u32 %v862, 4294901760
  %864 = vmatpush1.msra.mxu0 %v863
  %865 = vmatprep.subr.mxu0 0.0
  %866 = vmatpush1.msra.mxu0 0.0
  %867 = vmatprep.subr.mxu0 0.0
  %868 = vmatpush1.msra.mxu0 0.0
  %869 = vmatprep.subr.mxu0 0.0
  %870 = vmatpush1.msra.mxu0 0.0
  %871 = vmatprep.subr.mxu0 0.0
  %872 = vmatpush1.msra.mxu0 0.0
  %873 = vmatprep.subr.mxu0 0.0
  %874 = vmatpush1.msra.mxu0 0.0
  %875 = vmatprep.subr.mxu0 0.0
  %876 = vmatpush1.msra.mxu0 0.0
  %877 = vmatprep.subr.mxu0 0.0
  %878 = vmatpush1.msra.mxu0 0.0
  %879 = vmatprep.subr.mxu0 0.0
  %880 = vmatpush1.msra.mxu0 0.0
  %881 = vmatprep.subr.mxu0 0.0
  %882 = vmatpush1.msra.mxu0 0.0
  %883 = vmatprep.subr.mxu0 0.0
  %884 = vmatpush1.msra.mxu0 0.0
  %885 = vmatprep.subr.mxu0 0.0
  %886 = vmatpush1.msra.mxu0 0.0
  %887 = vmatprep.subr.mxu0 0.0
  %888 = vmatpush1.msra.mxu0 0.0
  %889 = vmatprep.subr.mxu0 0.0
  %890 = vmatpush1.msra.mxu0 0.0
  %891 = vmatprep.subr.mxu0 0.0
  %892 = vmatpush1.msra.mxu0 0.0
  %893 = vmatprep.subr.mxu0 0.0
  %894 = vmatpush1.msra.mxu0 0.0
  %895 = vmatprep.subr.mxu0 0.0
  %896 = vmatpush1.msra.mxu0 0.0
  %897 = vmatprep.mubr.f32.mxu0 0.0
  %v898 = vand.u32 %v376, 4294901760
  %899 = vmatmul.mubr.f32.gmra.mrb[0].mxu0 %v898
  %v900 = vpop.f32.mrb[0].mxu0
  %v901 = vadd.f32 %v510, %v900
  %v902 = vpop.f32.mrb[0].mxu0
  %903 = vmatprep.mubr.f32.mxu0 0.0
  %v904 = vand.u32 %v377, 4294901760
  %905 = vmatmul.mubr.f32.gmra.mrb[0].mxu0 %v904
  %v906 = vpop.f32.mrb[0].mxu0
  %v907 = vadd.f32 %v520, %v906
  %v908 = vpop.f32.mrb[0].mxu0
  %909 = vmatprep.mubr.f32.mxu0 0.0
  %v910 = vand.u32 %v378, 4294901760
  %911 = vmatmul.mubr.f32.gmra.mrb[0].mxu0 %v910
  %v912 = vpop.f32.mrb[0].mxu0
  %v913 = vadd.f32 %v530, %v912
  %v914 = vpop.f32.mrb[0].mxu0
  %915 = vmatprep.mubr.f32.mxu0 0.0
  %v916 = vand.u32 %v379, 4294901760
  %917 = vmatmul.mubr.f32.gmra.mrb[0].mxu0 %v916
  %v918 = vpop.f32.mrb[0].mxu0
  %v919 = vadd.f32 %v540, %v918
  %v920 = vpop.f32.mrb[0].mxu0
  %921 = vmatprep.mubr.f32.mxu0 0.0
  %v922 = vand.u32 %v380, 4294901760
  %923 = vmatmul.mubr.f32.gmra.mrb[0].mxu0 %v922
  %v924 = vpop.f32.mrb[0].mxu0
  %v925 = vadd.f32 %v550, %v924
  %v926 = vpop.f32.mrb[0].mxu0
  %927 = vmatprep.mubr.f32.mxu0 0.0
  %v928 = vand.u32 %v381, 4294901760
  %929 = vmatmul.mubr.f32.gmra.mrb[0].mxu0 %v928
  %v930 = vpop.f32.mrb[0].mxu0
  %v931 = vadd.f32 %v560, %v930
  %v932 = vpop.f32.mrb[0].mxu0
  %933 = vmatprep.mubr.f32.mxu0 0.0
  %v934 = vand.u32 %v382, 4294901760
  %935 = vmatmul.mubr.f32.gmra.mrb[0].mxu0 %v934
  %v936 = vpop.f32.mrb[0].mxu0
  %v937 = vadd.f32 %v570, %v936
  %v938 = vpop.f32.mrb[0].mxu0
  %939 = vmatprep.mubr.f32.mxu0 0.0
  %v940 = vand.u32 %v383, 4294901760
  %941 = vmatmul.mubr.f32.gmra.mrb[0].mxu0 %v940
  %v942 = vpop.f32.mrb[0].mxu0
  %v943 = vadd.f32 %v580, %v942
  %v944 = vpop.f32.mrb[0].mxu0
  %945 = vmatprep.mubr.f32.mxu0 0.0
  %v946 = vand.u32 %v384, 4294901760
  %947 = vmatmul.mubr.f32.gmra.mrb[0].mxu0 %v946
  %v948 = vpop.f32.mrb[0].mxu0
  %v949 = vadd.f32 %v590, %v948
  %v950 = vpop.f32.mrb[0].mxu0
  %951 = vmatprep.mubr.f32.mxu0 0.0
  %v952 = vand.u32 %v385, 4294901760
  %953 = vmatmul.mubr.f32.gmra.mrb[0].mxu0 %v952
  %v954 = vpop.f32.mrb[0].mxu0
  %v955 = vadd.f32 %v600, %v954
  %v956 = vpop.f32.mrb[0].mxu0
  %957 = vmatprep.mubr.f32.mxu0 0.0
  %v958 = vand.u32 %v386, 4294901760
  %959 = vmatmul.mubr.f32.gmra.mrb[0].mxu0 %v958
  %v960 = vpop.f32.mrb[0].mxu0
  %v961 = vadd.f32 %v610, %v960
  %v962 = vpop.f32.mrb[0].mxu0
  %963 = vmatprep.mubr.f32.mxu0 0.0
  %v964 = vand.u32 %v387, 4294901760
  %965 = vmatmul.mubr.f32.gmra.mrb[0].mxu0 %v964
  %v966 = vpop.f32.mrb[0].mxu0
  %v967 = vadd.f32 %v620, %v966
  %v968 = vpop.f32.mrb[0].mxu0
  %969 = vmatprep.mubr.f32.mxu0 0.0
  %v970 = vand.u32 %v388, 4294901760
  %971 = vmatmul.mubr.f32.gmra.mrb[0].mxu0 %v970
  %v972 = vpop.f32.mrb[0].mxu0
  %v973 = vadd.f32 %v630, %v972
  %v974 = vpop.f32.mrb[0].mxu0
  %975 = vmatprep.mubr.f32.mxu0 0.0
  %v976 = vand.u32 %v389, 4294901760
  %977 = vmatmul.mubr.f32.gmra.mrb[0].mxu0 %v976
  %v978 = vpop.f32.mrb[0].mxu0
  %v979 = vadd.f32 %v640, %v978
  %v980 = vpop.f32.mrb[0].mxu0
  %981 = vmatprep.mubr.f32.mxu0 0.0
  %v982 = vand.u32 %v390, 4294901760
  %983 = vmatmul.mubr.f32.gmra.mrb[0].mxu0 %v982
  %v984 = vpop.f32.mrb[0].mxu0
  %v985 = vadd.f32 %v650, %v984
  %v986 = vpop.f32.mrb[0].mxu0
  %987 = vmatprep.mubr.f32.mxu0 0.0
  %v988 = vand.u32 %v391, 4294901760
  %989 = vmatmul.mubr.f32.gmra.mrb[0].mxu0 %v988
  %v990 = vpop.f32.mrb[0].mxu0
  %v991 = vadd.f32 %v660, %v990
  %v992 = vpop.f32.mrb[0].mxu0
  %993 = vmatprep.mubr.f32.mxu0 0.0
  %v994 = vand.u32 %v392, 4294901760
  %995 = vmatmul.mubr.f32.gmra.mrb[0].mxu0 %v994
  %v996 = vpop.f32.mrb[0].mxu0
  %v997 = vadd.f32 %v670, %v996
  %v998 = vpop.f32.mrb[0].mxu0
  %999 = vmatprep.mubr.f32.mxu0 0.0
  %v1000 = vand.u32 %v393, 4294901760
  %1001 = vmatmul.mubr.f32.gmra.mrb[0].mxu0 %v1000
  %v1002 = vpop.f32.mrb[0].mxu0
  %v1003 = vadd.f32 %v680, %v1002
  %v1004 = vpop.f32.mrb[0].mxu0
  %1005 = vmatprep.mubr.f32.mxu0 0.0
  %v1006 = vand.u32 %v394, 4294901760
  %1007 = vmatmul.mubr.f32.gmra.mrb[0].mxu0 %v1006
  %v1008 = vpop.f32.mrb[0].mxu0
  %v1009 = vadd.f32 %v690, %v1008
  %v1010 = vpop.f32.mrb[0].mxu0
  %1011 = vmatprep.mubr.f32.mxu0 0.0
  %v1012 = vand.u32 %v395, 4294901760
  %1013 = vmatmul.mubr.f32.gmra.mrb[0].mxu0 %v1012
  %v1014 = vpop.f32.mrb[0].mxu0
  %v1015 = vadd.f32 %v700, %v1014
  %v1016 = vpop.f32.mrb[0].mxu0
  %1017 = vmatprep.mubr.f32.mxu0 0.0
  %v1018 = vand.u32 %v396, 4294901760
  %1019 = vmatmul.mubr.f32.gmra.mrb[0].mxu0 %v1018
  %v1020 = vpop.f32.mrb[0].mxu0
  %v1021 = vadd.f32 %v710, %v1020
  %v1022 = vpop.f32.mrb[0].mxu0
  %1023 = vmatprep.mubr.f32.mxu0 0.0
  %v1024 = vand.u32 %v397, 4294901760
  %1025 = vmatmul.mubr.f32.gmra.mrb[0].mxu0 %v1024
  %v1026 = vpop.f32.mrb[0].mxu0
  %v1027 = vadd.f32 %v720, %v1026
  %v1028 = vpop.f32.mrb[0].mxu0
  %1029 = vmatprep.mubr.f32.mxu0 0.0
  %v1030 = vand.u32 %v398, 4294901760
  %1031 = vmatmul.mubr.f32.gmra.mrb[0].mxu0 %v1030
  %v1032 = vpop.f32.mrb[0].mxu0
  %v1033 = vadd.f32 %v730, %v1032
  %v1034 = vpop.f32.mrb[0].mxu0
  %1035 = vmatprep.mubr.f32.mxu0 0.0
  %v1036 = vand.u32 %v399, 4294901760
  %1037 = vmatmul.mubr.f32.gmra.mrb[0].mxu0 %v1036
  %v1038 = vpop.f32.mrb[0].mxu0
  %v1039 = vadd.f32 %v740, %v1038
  %v1040 = vpop.f32.mrb[0].mxu0
  %1041 = vmatprep.mubr.f32.mxu0 0.0
  %v1042 = vand.u32 %v400, 4294901760
  %1043 = vmatmul.mubr.f32.gmra.mrb[0].mxu0 %v1042
  %v1044 = vpop.f32.mrb[0].mxu0
  %v1045 = vadd.f32 %v750, %v1044
  %v1046 = vpop.f32.mrb[0].mxu0
  %1047 = vdwg.mxu0
  %1048 = vmatprep.subr.mxu0 0.0
  %v1049 = vand.u32 %v401, 4294901760
  %v1050 = vsub.f32 %v401, %v1049
  %1051 = vmatpush1.msra.mxu0 %v1050
  %1052 = vmatprep.subr.mxu0 0.0
  %v1053 = vand.u32 %v402, 4294901760
  %v1054 = vsub.f32 %v402, %v1053
  %1055 = vmatpush1.msra.mxu0 %v1054
  %1056 = vmatprep.subr.mxu0 0.0
  %v1057 = vand.u32 %v403, 4294901760
  %v1058 = vsub.f32 %v403, %v1057
  %1059 = vmatpush1.msra.mxu0 %v1058
  %1060 = vmatprep.subr.mxu0 0.0
  %v1061 = vand.u32 %v404, 4294901760
  %v1062 = vsub.f32 %v404, %v1061
  %1063 = vmatpush1.msra.mxu0 %v1062
  %1064 = vmatprep.subr.mxu0 0.0
  %v1065 = vand.u32 %v405, 4294901760
  %v1066 = vsub.f32 %v405, %v1065
  %1067 = vmatpush1.msra.mxu0 %v1066
  %1068 = vmatprep.subr.mxu0 0.0
  %v1069 = vand.u32 %v406, 4294901760
  %v1070 = vsub.f32 %v406, %v1069
  %1071 = vmatpush1.msra.mxu0 %v1070
  %1072 = vmatprep.subr.mxu0 0.0
  %v1073 = vand.u32 %v407, 4294901760
  %v1074 = vsub.f32 %v407, %v1073
  %1075 = vmatpush1.msra.mxu0 %v1074
  %1076 = vmatprep.subr.mxu0 0.0
  %v1077 = vand.u32 %v408, 4294901760
  %v1078 = vsub.f32 %v408, %v1077
  %1079 = vmatpush1.msra.mxu0 %v1078
  %1080 = vmatprep.subr.mxu0 0.0
  %v1081 = vand.u32 %v409, 4294901760
  %v1082 = vsub.f32 %v409, %v1081
  %1083 = vmatpush1.msra.mxu0 %v1082
  %1084 = vmatprep.subr.mxu0 0.0
  %v1085 = vand.u32 %v410, 4294901760
  %v1086 = vsub.f32 %v410, %v1085
  %1087 = vmatpush1.msra.mxu0 %v1086
  %1088 = vmatprep.subr.mxu0 0.0
  %v1089 = vand.u32 %v411, 4294901760
  %v1090 = vsub.f32 %v411, %v1089
  %1091 = vmatpush1.msra.mxu0 %v1090
  %1092 = vmatprep.subr.mxu0 0.0
  %v1093 = vand.u32 %v412, 4294901760
  %v1094 = vsub.f32 %v412, %v1093
  %1095 = vmatpush1.msra.mxu0 %v1094
  %1096 = vmatprep.subr.mxu0 0.0
  %v1097 = vand.u32 %v413, 4294901760
  %v1098 = vsub.f32 %v413, %v1097
  %1099 = vmatpush1.msra.mxu0 %v1098
  %1100 = vmatprep.subr.mxu0 0.0
  %v1101 = vand.u32 %v414, 4294901760
  %v1102 = vsub.f32 %v414, %v1101
  %1103 = vmatpush1.msra.mxu0 %v1102
  %1104 = vmatprep.subr.mxu0 0.0
  %v1105 = vand.u32 %v415, 4294901760
  %v1106 = vsub.f32 %v415, %v1105
  %1107 = vmatpush1.msra.mxu0 %v1106
  %1108 = vmatprep.subr.mxu0 0.0
  %v1109 = vand.u32 %v416, 4294901760
  %v1110 = vsub.f32 %v416, %v1109
  %1111 = vmatpush1.msra.mxu0 %v1110
  %1112 = vmatprep.subr.mxu0 0.0
  %1113 = vmatpush1.msra.mxu0 0.0
  %1114 = vmatprep.subr.mxu0 0.0
  %1115 = vmatpush1.msra.mxu0 0.0
  %1116 = vmatprep.subr.mxu0 0.0
  %1117 = vmatpush1.msra.mxu0 0.0
  %1118 = vmatprep.subr.mxu0 0.0
  %1119 = vmatpush1.msra.mxu0 0.0
  %1120 = vmatprep.subr.mxu0 0.0
  %1121 = vmatpush1.msra.mxu0 0.0
  %1122 = vmatprep.subr.mxu0 0.0
  %1123 = vmatpush1.msra.mxu0 0.0
  %1124 = vmatprep.subr.mxu0 0.0
  %1125 = vmatpush1.msra.mxu0 0.0
  %1126 = vmatprep.subr.mxu0 0.0
  %1127 = vmatpush1.msra.mxu0 0.0
  %1128 = vmatprep.subr.mxu0 0.0
  %1129 = vmatpush1.msra.mxu0 0.0
  %1130 = vmatprep.subr.mxu0 0.0
  %1131 = vmatpush1.msra.mxu0 0.0
  %1132 = vmatprep.subr.mxu0 0.0
  %1133 = vmatpush1.msra.mxu0 0.0
  %1134 = vmatprep.subr.mxu0 0.0
  %1135 = vmatpush1.msra.mxu0 0.0
  %1136 = vmatprep.subr.mxu0 0.0
  %1137 = vmatpush1.msra.mxu0 0.0
  %1138 = vmatprep.subr.mxu0 0.0
  %1139 = vmatpush1.msra.mxu0 0.0
  %1140 = vmatprep.subr.mxu0 0.0
  %1141 = vmatpush1.msra.mxu0 0.0
  %1142 = vmatprep.subr.mxu0 0.0
  %1143 = vmatpush1.msra.mxu0 0.0
  %1144 = vmatprep.mubr.f32.mxu0 0.0
  %v1145 = vand.u32 %v376, 4294901760
  %v1146 = vsub.f32 %v376, %v1145
  %1147 = vmatmul.mubr.f32.gmra.mrb[0].mxu0 %v1146
  %v1148 = vpop.f32.mrb[0].mxu0
  %v1149 = vadd.f32 %v901, %v1148
  %v1150 = vpop.f32.mrb[0].mxu0
  %1151 = vmatprep.mubr.f32.mxu0 0.0
  %v1152 = vand.u32 %v377, 4294901760
  %v1153 = vsub.f32 %v377, %v1152
  %1154 = vmatmul.mubr.f32.gmra.mrb[0].mxu0 %v1153
  %v1155 = vpop.f32.mrb[0].mxu0
  %v1156 = vadd.f32 %v907, %v1155
  %v1157 = vpop.f32.mrb[0].mxu0
  %1158 = vmatprep.mubr.f32.mxu0 0.0
  %v1159 = vand.u32 %v378, 4294901760
  %v1160 = vsub.f32 %v378, %v1159
  %1161 = vmatmul.mubr.f32.gmra.mrb[0].mxu0 %v1160
  %v1162 = vpop.f32.mrb[0].mxu0
  %v1163 = vadd.f32 %v913, %v1162
  %v1164 = vpop.f32.mrb[0].mxu0
  %1165 = vmatprep.mubr.f32.mxu0 0.0
  %v1166 = vand.u32 %v379, 4294901760
  %v1167 = vsub.f32 %v379, %v1166
  %1168 = vmatmul.mubr.f32.gmra.mrb[0].mxu0 %v1167
  %v1169 = vpop.f32.mrb[0].mxu0
  %v1170 = vadd.f32 %v919, %v1169
  %v1171 = vpop.f32.mrb[0].mxu0
  %1172 = vmatprep.mubr.f32.mxu0 0.0
  %v1173 = vand.u32 %v380, 4294901760
  %v1174 = vsub.f32 %v380, %v1173
  %1175 = vmatmul.mubr.f32.gmra.mrb[0].mxu0 %v1174
  %v1176 = vpop.f32.mrb[0].mxu0
  %v1177 = vadd.f32 %v925, %v1176
  %v1178 = vpop.f32.mrb[0].mxu0
  %1179 = vmatprep.mubr.f32.mxu0 0.0
  %v1180 = vand.u32 %v381, 4294901760
  %v1181 = vsub.f32 %v381, %v1180
  %1182 = vmatmul.mubr.f32.gmra.mrb[0].mxu0 %v1181
  %v1183 = vpop.f32.mrb[0].mxu0
  %v1184 = vadd.f32 %v931, %v1183
  %v1185 = vpop.f32.mrb[0].mxu0
  %1186 = vmatprep.mubr.f32.mxu0 0.0
  %v1187 = vand.u32 %v382, 4294901760
  %v1188 = vsub.f32 %v382, %v1187
  %1189 = vmatmul.mubr.f32.gmra.mrb[0].mxu0 %v1188
  %v1190 = vpop.f32.mrb[0].mxu0
  %v1191 = vadd.f32 %v937, %v1190
  %v1192 = vpop.f32.mrb[0].mxu0
  %1193 = vmatprep.mubr.f32.mxu0 0.0
  %v1194 = vand.u32 %v383, 4294901760
  %v1195 = vsub.f32 %v383, %v1194
  %1196 = vmatmul.mubr.f32.gmra.mrb[0].mxu0 %v1195
  %v1197 = vpop.f32.mrb[0].mxu0
  %v1198 = vadd.f32 %v943, %v1197
  %v1199 = vpop.f32.mrb[0].mxu0
  %1200 = vmatprep.mubr.f32.mxu0 0.0
  %v1201 = vand.u32 %v384, 4294901760
  %v1202 = vsub.f32 %v384, %v1201
  %1203 = vmatmul.mubr.f32.gmra.mrb[0].mxu0 %v1202
  %v1204 = vpop.f32.mrb[0].mxu0
  %v1205 = vadd.f32 %v949, %v1204
  %v1206 = vpop.f32.mrb[0].mxu0
  %1207 = vmatprep.mubr.f32.mxu0 0.0
  %v1208 = vand.u32 %v385, 4294901760
  %v1209 = vsub.f32 %v385, %v1208
  %1210 = vmatmul.mubr.f32.gmra.mrb[0].mxu0 %v1209
  %v1211 = vpop.f32.mrb[0].mxu0
  %v1212 = vadd.f32 %v955, %v1211
  %v1213 = vpop.f32.mrb[0].mxu0
  %1214 = vmatprep.mubr.f32.mxu0 0.0
  %v1215 = vand.u32 %v386, 4294901760
  %v1216 = vsub.f32 %v386, %v1215
  %1217 = vmatmul.mubr.f32.gmra.mrb[0].mxu0 %v1216
  %v1218 = vpop.f32.mrb[0].mxu0
  %v1219 = vadd.f32 %v961, %v1218
  %v1220 = vpop.f32.mrb[0].mxu0
  %1221 = vmatprep.mubr.f32.mxu0 0.0
  %v1222 = vand.u32 %v387, 4294901760
  %v1223 = vsub.f32 %v387, %v1222
  %1224 = vmatmul.mubr.f32.gmra.mrb[0].mxu0 %v1223
  %v1225 = vpop.f32.mrb[0].mxu0
  %v1226 = vadd.f32 %v967, %v1225
  %v1227 = vpop.f32.mrb[0].mxu0
  %1228 = vmatprep.mubr.f32.mxu0 0.0
  %v1229 = vand.u32 %v388, 4294901760
  %v1230 = vsub.f32 %v388, %v1229
  %1231 = vmatmul.mubr.f32.gmra.mrb[0].mxu0 %v1230
  %v1232 = vpop.f32.mrb[0].mxu0
  %v1233 = vadd.f32 %v973, %v1232
  %v1234 = vpop.f32.mrb[0].mxu0
  %1235 = vmatprep.mubr.f32.mxu0 0.0
  %v1236 = vand.u32 %v389, 4294901760
  %v1237 = vsub.f32 %v389, %v1236
  %1238 = vmatmul.mubr.f32.gmra.mrb[0].mxu0 %v1237
  %v1239 = vpop.f32.mrb[0].mxu0
  %v1240 = vadd.f32 %v979, %v1239
  %v1241 = vpop.f32.mrb[0].mxu0
  %1242 = vmatprep.mubr.f32.mxu0 0.0
  %v1243 = vand.u32 %v390, 4294901760
  %v1244 = vsub.f32 %v390, %v1243
  %1245 = vmatmul.mubr.f32.gmra.mrb[0].mxu0 %v1244
  %v1246 = vpop.f32.mrb[0].mxu0
  %v1247 = vadd.f32 %v985, %v1246
  %v1248 = vpop.f32.mrb[0].mxu0
  %1249 = vmatprep.mubr.f32.mxu0 0.0
  %v1250 = vand.u32 %v391, 4294901760
  %v1251 = vsub.f32 %v391, %v1250
  %1252 = vmatmul.mubr.f32.gmra.mrb[0].mxu0 %v1251
  %v1253 = vpop.f32.mrb[0].mxu0
  %v1254 = vadd.f32 %v991, %v1253
  %v1255 = vpop.f32.mrb[0].mxu0
  %1256 = vmatprep.mubr.f32.mxu0 0.0
  %v1257 = vand.u32 %v392, 4294901760
  %v1258 = vsub.f32 %v392, %v1257
  %1259 = vmatmul.mubr.f32.gmra.mrb[0].mxu0 %v1258
  %v1260 = vpop.f32.mrb[0].mxu0
  %v1261 = vadd.f32 %v997, %v1260
  %v1262 = vpop.f32.mrb[0].mxu0
  %1263 = vmatprep.mubr.f32.mxu0 0.0
  %v1264 = vand.u32 %v393, 4294901760
  %v1265 = vsub.f32 %v393, %v1264
  %1266 = vmatmul.mubr.f32.gmra.mrb[0].mxu0 %v1265
  %v1267 = vpop.f32.mrb[0].mxu0
  %v1268 = vadd.f32 %v1003, %v1267
  %v1269 = vpop.f32.mrb[0].mxu0
  %1270 = vmatprep.mubr.f32.mxu0 0.0
  %v1271 = vand.u32 %v394, 4294901760
  %v1272 = vsub.f32 %v394, %v1271
  %1273 = vmatmul.mubr.f32.gmra.mrb[0].mxu0 %v1272
  %v1274 = vpop.f32.mrb[0].mxu0
  %v1275 = vadd.f32 %v1009, %v1274
  %v1276 = vpop.f32.mrb[0].mxu0
  %1277 = vmatprep.mubr.f32.mxu0 0.0
  %v1278 = vand.u32 %v395, 4294901760
  %v1279 = vsub.f32 %v395, %v1278
  %1280 = vmatmul.mubr.f32.gmra.mrb[0].mxu0 %v1279
  %v1281 = vpop.f32.mrb[0].mxu0
  %v1282 = vadd.f32 %v1015, %v1281
  %v1283 = vpop.f32.mrb[0].mxu0
  %1284 = vmatprep.mubr.f32.mxu0 0.0
  %v1285 = vand.u32 %v396, 4294901760
  %v1286 = vsub.f32 %v396, %v1285
  %1287 = vmatmul.mubr.f32.gmra.mrb[0].mxu0 %v1286
  %v1288 = vpop.f32.mrb[0].mxu0
  %v1289 = vadd.f32 %v1021, %v1288
  %v1290 = vpop.f32.mrb[0].mxu0
  %1291 = vmatprep.mubr.f32.mxu0 0.0
  %v1292 = vand.u32 %v397, 4294901760
  %v1293 = vsub.f32 %v397, %v1292
  %1294 = vmatmul.mubr.f32.gmra.mrb[0].mxu0 %v1293
  %v1295 = vpop.f32.mrb[0].mxu0
  %v1296 = vadd.f32 %v1027, %v1295
  %v1297 = vpop.f32.mrb[0].mxu0
  %1298 = vmatprep.mubr.f32.mxu0 0.0
  %v1299 = vand.u32 %v398, 4294901760
  %v1300 = vsub.f32 %v398, %v1299
  %1301 = vmatmul.mubr.f32.gmra.mrb[0].mxu0 %v1300
  %v1302 = vpop.f32.mrb[0].mxu0
  %v1303 = vadd.f32 %v1033, %v1302
  %v1304 = vpop.f32.mrb[0].mxu0
  %1305 = vmatprep.mubr.f32.mxu0 0.0
  %v1306 = vand.u32 %v399, 4294901760
  %v1307 = vsub.f32 %v399, %v1306
  %1308 = vmatmul.mubr.f32.gmra.mrb[0].mxu0 %v1307
  %v1309 = vpop.f32.mrb[0].mxu0
  %v1310 = vadd.f32 %v1039, %v1309
  %v1311 = vpop.f32.mrb[0].mxu0
  %1312 = vmatprep.mubr.f32.mxu0 0.0
  %v1313 = vand.u32 %v400, 4294901760
  %v1314 = vsub.f32 %v400, %v1313
  %1315 = vmatmul.mubr.f32.gmra.mrb[0].mxu0 %v1314
  %v1316 = vpop.f32.mrb[0].mxu0
  %v1317 = vadd.f32 %v1045, %v1316
  %v1318 = vpop.f32.mrb[0].mxu0
  %1319 = vdwg.mxu0
  %1320 = vmatprep.subr.mxu0 0.0
  %v1321 = vand.u32 %v401, 4294901760
  %1322 = vmatpush1.msra.mxu0 %v1321
  %1323 = vmatprep.subr.mxu0 0.0
  %v1324 = vand.u32 %v402, 4294901760
  %1325 = vmatpush1.msra.mxu0 %v1324
  %1326 = vmatprep.subr.mxu0 0.0
  %v1327 = vand.u32 %v403, 4294901760
  %1328 = vmatpush1.msra.mxu0 %v1327
  %1329 = vmatprep.subr.mxu0 0.0
  %v1330 = vand.u32 %v404, 4294901760
  %1331 = vmatpush1.msra.mxu0 %v1330
  %1332 = vmatprep.subr.mxu0 0.0
  %v1333 = vand.u32 %v405, 4294901760
  %1334 = vmatpush1.msra.mxu0 %v1333
  %1335 = vmatprep.subr.mxu0 0.0
  %v1336 = vand.u32 %v406, 4294901760
  %1337 = vmatpush1.msra.mxu0 %v1336
  %1338 = vmatprep.subr.mxu0 0.0
  %v1339 = vand.u32 %v407, 4294901760
  %1340 = vmatpush1.msra.mxu0 %v1339
  %1341 = vmatprep.subr.mxu0 0.0
  %v1342 = vand.u32 %v408, 4294901760
  %1343 = vmatpush1.msra.mxu0 %v1342
  %1344 = vmatprep.subr.mxu0 0.0
  %v1345 = vand.u32 %v409, 4294901760
  %1346 = vmatpush1.msra.mxu0 %v1345
  %1347 = vmatprep.subr.mxu0 0.0
  %v1348 = vand.u32 %v410, 4294901760
  %1349 = vmatpush1.msra.mxu0 %v1348
  %1350 = vmatprep.subr.mxu0 0.0
  %v1351 = vand.u32 %v411, 4294901760
  %1352 = vmatpush1.msra.mxu0 %v1351
  %1353 = vmatprep.subr.mxu0 0.0
  %v1354 = vand.u32 %v412, 4294901760
  %1355 = vmatpush1.msra.mxu0 %v1354
  %1356 = vmatprep.subr.mxu0 0.0
  %v1357 = vand.u32 %v413, 4294901760
  %1358 = vmatpush1.msra.mxu0 %v1357
  %1359 = vmatprep.subr.mxu0 0.0
  %v1360 = vand.u32 %v414, 4294901760
  %1361 = vmatpush1.msra.mxu0 %v1360
  %1362 = vmatprep.subr.mxu0 0.0
  %v1363 = vand.u32 %v415, 4294901760
  %1364 = vmatpush1.msra.mxu0 %v1363
  %1365 = vmatprep.subr.mxu0 0.0
  %v1366 = vand.u32 %v416, 4294901760
  %1367 = vmatpush1.msra.mxu0 %v1366
  %1368 = vmatprep.subr.mxu0 0.0
  %1369 = vmatpush1.msra.mxu0 0.0
  %1370 = vmatprep.subr.mxu0 0.0
  %1371 = vmatpush1.msra.mxu0 0.0
  %1372 = vmatprep.subr.mxu0 0.0
  %1373 = vmatpush1.msra.mxu0 0.0
  %1374 = vmatprep.subr.mxu0 0.0
  %1375 = vmatpush1.msra.mxu0 0.0
  %1376 = vmatprep.subr.mxu0 0.0
  %1377 = vmatpush1.msra.mxu0 0.0
  %1378 = vmatprep.subr.mxu0 0.0
  %1379 = vmatpush1.msra.mxu0 0.0
  %1380 = vmatprep.subr.mxu0 0.0
  %1381 = vmatpush1.msra.mxu0 0.0
  %1382 = vmatprep.subr.mxu0 0.0
  %1383 = vmatpush1.msra.mxu0 0.0
  %1384 = vmatprep.subr.mxu0 0.0
  %1385 = vmatpush1.msra.mxu0 0.0
  %1386 = vmatprep.subr.mxu0 0.0
  %1387 = vmatpush1.msra.mxu0 0.0
  %1388 = vmatprep.subr.mxu0 0.0
  %1389 = vmatpush1.msra.mxu0 0.0
  %1390 = vmatprep.subr.mxu0 0.0
  %1391 = vmatpush1.msra.mxu0 0.0
  %1392 = vmatprep.subr.mxu0 0.0
  %1393 = vmatpush1.msra.mxu0 0.0
  %1394 = vmatprep.subr.mxu0 0.0
  %1395 = vmatpush1.msra.mxu0 0.0
  %1396 = vmatprep.subr.mxu0 0.0
  %1397 = vmatpush1.msra.mxu0 0.0
  %1398 = vmatprep.subr.mxu0 0.0
  %1399 = vmatpush1.msra.mxu0 0.0
  %1400 = vmatprep.mubr.f32.mxu0 0.0
  %v1401 = vand.u32 %v376, 4294901760
  %v1402 = vsub.f32 %v376, %v1401
  %v1403 = vand.u32 %v1402, 4294901760
  %1404 = vmatmul.mubr.f32.gmra.mrb[0].mxu0 %v1403
  %v1405 = vpop.f32.mrb[0].mxu0
  %v1406 = vadd.f32 %v1149, %v1405
  %v1407 = vpop.f32.mrb[0].mxu0
  %1408 = vmatprep.mubr.f32.mxu0 0.0
  %v1409 = vand.u32 %v377, 4294901760
  %v1410 = vsub.f32 %v377, %v1409
  %v1411 = vand.u32 %v1410, 4294901760
  %1412 = vmatmul.mubr.f32.gmra.mrb[0].mxu0 %v1411
  %v1413 = vpop.f32.mrb[0].mxu0
  %v1414 = vadd.f32 %v1156, %v1413
  %v1415 = vpop.f32.mrb[0].mxu0
  %1416 = vmatprep.mubr.f32.mxu0 0.0
  %v1417 = vand.u32 %v378, 4294901760
  %v1418 = vsub.f32 %v378, %v1417
  %v1419 = vand.u32 %v1418, 4294901760
  %1420 = vmatmul.mubr.f32.gmra.mrb[0].mxu0 %v1419
  %v1421 = vpop.f32.mrb[0].mxu0
  %v1422 = vadd.f32 %v1163, %v1421
  %v1423 = vpop.f32.mrb[0].mxu0
  %1424 = vmatprep.mubr.f32.mxu0 0.0
  %v1425 = vand.u32 %v379, 4294901760
  %v1426 = vsub.f32 %v379, %v1425
  %v1427 = vand.u32 %v1426, 4294901760
  %1428 = vmatmul.mubr.f32.gmra.mrb[0].mxu0 %v1427
  %v1429 = vpop.f32.mrb[0].mxu0
  %v1430 = vadd.f32 %v1170, %v1429
  %v1431 = vpop.f32.mrb[0].mxu0
  %1432 = vmatprep.mubr.f32.mxu0 0.0
  %v1433 = vand.u32 %v380, 4294901760
  %v1434 = vsub.f32 %v380, %v1433
  %v1435 = vand.u32 %v1434, 4294901760
  %1436 = vmatmul.mubr.f32.gmra.mrb[0].mxu0 %v1435
  %v1437 = vpop.f32.mrb[0].mxu0
  %v1438 = vadd.f32 %v1177, %v1437
  %v1439 = vpop.f32.mrb[0].mxu0
  %1440 = vmatprep.mubr.f32.mxu0 0.0
  %v1441 = vand.u32 %v381, 4294901760
  %v1442 = vsub.f32 %v381, %v1441
  %v1443 = vand.u32 %v1442, 4294901760
  %1444 = vmatmul.mubr.f32.gmra.mrb[0].mxu0 %v1443
  %v1445 = vpop.f32.mrb[0].mxu0
  %v1446 = vadd.f32 %v1184, %v1445
  %v1447 = vpop.f32.mrb[0].mxu0
  %1448 = vmatprep.mubr.f32.mxu0 0.0
  %v1449 = vand.u32 %v382, 4294901760
  %v1450 = vsub.f32 %v382, %v1449
  %v1451 = vand.u32 %v1450, 4294901760
  %1452 = vmatmul.mubr.f32.gmra.mrb[0].mxu0 %v1451
  %v1453 = vpop.f32.mrb[0].mxu0
  %v1454 = vadd.f32 %v1191, %v1453
  %v1455 = vpop.f32.mrb[0].mxu0
  %1456 = vmatprep.mubr.f32.mxu0 0.0
  %v1457 = vand.u32 %v383, 4294901760
  %v1458 = vsub.f32 %v383, %v1457
  %v1459 = vand.u32 %v1458, 4294901760
  %1460 = vmatmul.mubr.f32.gmra.mrb[0].mxu0 %v1459
  %v1461 = vpop.f32.mrb[0].mxu0
  %v1462 = vadd.f32 %v1198, %v1461
  %v1463 = vpop.f32.mrb[0].mxu0
  %1464 = vmatprep.mubr.f32.mxu0 0.0
  %v1465 = vand.u32 %v384, 4294901760
  %v1466 = vsub.f32 %v384, %v1465
  %v1467 = vand.u32 %v1466, 4294901760
  %1468 = vmatmul.mubr.f32.gmra.mrb[0].mxu0 %v1467
  %v1469 = vpop.f32.mrb[0].mxu0
  %v1470 = vadd.f32 %v1205, %v1469
  %v1471 = vpop.f32.mrb[0].mxu0
  %1472 = vmatprep.mubr.f32.mxu0 0.0
  %v1473 = vand.u32 %v385, 4294901760
  %v1474 = vsub.f32 %v385, %v1473
  %v1475 = vand.u32 %v1474, 4294901760
  %1476 = vmatmul.mubr.f32.gmra.mrb[0].mxu0 %v1475
  %v1477 = vpop.f32.mrb[0].mxu0
  %v1478 = vadd.f32 %v1212, %v1477
  %v1479 = vpop.f32.mrb[0].mxu0
  %1480 = vmatprep.mubr.f32.mxu0 0.0
  %v1481 = vand.u32 %v386, 4294901760
  %v1482 = vsub.f32 %v386, %v1481
  %v1483 = vand.u32 %v1482, 4294901760
  %1484 = vmatmul.mubr.f32.gmra.mrb[0].mxu0 %v1483
  %v1485 = vpop.f32.mrb[0].mxu0
  %v1486 = vadd.f32 %v1219, %v1485
  %v1487 = vpop.f32.mrb[0].mxu0
  %1488 = vmatprep.mubr.f32.mxu0 0.0
  %v1489 = vand.u32 %v387, 4294901760
  %v1490 = vsub.f32 %v387, %v1489
  %v1491 = vand.u32 %v1490, 4294901760
  %1492 = vmatmul.mubr.f32.gmra.mrb[0].mxu0 %v1491
  %v1493 = vpop.f32.mrb[0].mxu0
  %v1494 = vadd.f32 %v1226, %v1493
  %v1495 = vpop.f32.mrb[0].mxu0
  %1496 = vmatprep.mubr.f32.mxu0 0.0
  %v1497 = vand.u32 %v388, 4294901760
  %v1498 = vsub.f32 %v388, %v1497
  %v1499 = vand.u32 %v1498, 4294901760
  %1500 = vmatmul.mubr.f32.gmra.mrb[0].mxu0 %v1499
  %v1501 = vpop.f32.mrb[0].mxu0
  %v1502 = vadd.f32 %v1233, %v1501
  %v1503 = vpop.f32.mrb[0].mxu0
  %1504 = vmatprep.mubr.f32.mxu0 0.0
  %v1505 = vand.u32 %v389, 4294901760
  %v1506 = vsub.f32 %v389, %v1505
  %v1507 = vand.u32 %v1506, 4294901760
  %1508 = vmatmul.mubr.f32.gmra.mrb[0].mxu0 %v1507
  %v1509 = vpop.f32.mrb[0].mxu0
  %v1510 = vadd.f32 %v1240, %v1509
  %v1511 = vpop.f32.mrb[0].mxu0
  %1512 = vmatprep.mubr.f32.mxu0 0.0
  %v1513 = vand.u32 %v390, 4294901760
  %v1514 = vsub.f32 %v390, %v1513
  %v1515 = vand.u32 %v1514, 4294901760
  %1516 = vmatmul.mubr.f32.gmra.mrb[0].mxu0 %v1515
  %v1517 = vpop.f32.mrb[0].mxu0
  %v1518 = vadd.f32 %v1247, %v1517
  %v1519 = vpop.f32.mrb[0].mxu0
  %1520 = vmatprep.mubr.f32.mxu0 0.0
  %v1521 = vand.u32 %v391, 4294901760
  %v1522 = vsub.f32 %v391, %v1521
  %v1523 = vand.u32 %v1522, 4294901760
  %1524 = vmatmul.mubr.f32.gmra.mrb[0].mxu0 %v1523
  %v1525 = vpop.f32.mrb[0].mxu0
  %v1526 = vadd.f32 %v1254, %v1525
  %v1527 = vpop.f32.mrb[0].mxu0
  %1528 = vmatprep.mubr.f32.mxu0 0.0
  %v1529 = vand.u32 %v392, 4294901760
  %v1530 = vsub.f32 %v392, %v1529
  %v1531 = vand.u32 %v1530, 4294901760
  %1532 = vmatmul.mubr.f32.gmra.mrb[0].mxu0 %v1531
  %v1533 = vpop.f32.mrb[0].mxu0
  %v1534 = vadd.f32 %v1261, %v1533
  %v1535 = vpop.f32.mrb[0].mxu0
  %1536 = vmatprep.mubr.f32.mxu0 0.0
  %v1537 = vand.u32 %v393, 4294901760
  %v1538 = vsub.f32 %v393, %v1537
  %v1539 = vand.u32 %v1538, 4294901760
  %1540 = vmatmul.mubr.f32.gmra.mrb[0].mxu0 %v1539
  %v1541 = vpop.f32.mrb[0].mxu0
  %v1542 = vadd.f32 %v1268, %v1541
  %v1543 = vpop.f32.mrb[0].mxu0
  %1544 = vmatprep.mubr.f32.mxu0 0.0
  %v1545 = vand.u32 %v394, 4294901760
  %v1546 = vsub.f32 %v394, %v1545
  %v1547 = vand.u32 %v1546, 4294901760
  %1548 = vmatmul.mubr.f32.gmra.mrb[0].mxu0 %v1547
  %v1549 = vpop.f32.mrb[0].mxu0
  %v1550 = vadd.f32 %v1275, %v1549
  %v1551 = vpop.f32.mrb[0].mxu0
  %1552 = vmatprep.mubr.f32.mxu0 0.0
  %v1553 = vand.u32 %v395, 4294901760
  %v1554 = vsub.f32 %v395, %v1553
  %v1555 = vand.u32 %v1554, 4294901760
  %1556 = vmatmul.mubr.f32.gmra.mrb[0].mxu0 %v1555
  %v1557 = vpop.f32.mrb[0].mxu0
  %v1558 = vadd.f32 %v1282, %v1557
  %v1559 = vpop.f32.mrb[0].mxu0
  %1560 = vmatprep.mubr.f32.mxu0 0.0
  %v1561 = vand.u32 %v396, 4294901760
  %v1562 = vsub.f32 %v396, %v1561
  %v1563 = vand.u32 %v1562, 4294901760
  %1564 = vmatmul.mubr.f32.gmra.mrb[0].mxu0 %v1563
  %v1565 = vpop.f32.mrb[0].mxu0
  %v1566 = vadd.f32 %v1289, %v1565
  %v1567 = vpop.f32.mrb[0].mxu0
  %1568 = vmatprep.mubr.f32.mxu0 0.0
  %v1569 = vand.u32 %v397, 4294901760
  %v1570 = vsub.f32 %v397, %v1569
  %v1571 = vand.u32 %v1570, 4294901760
  %1572 = vmatmul.mubr.f32.gmra.mrb[0].mxu0 %v1571
  %v1573 = vpop.f32.mrb[0].mxu0
  %v1574 = vadd.f32 %v1296, %v1573
  %v1575 = vpop.f32.mrb[0].mxu0
  %1576 = vmatprep.mubr.f32.mxu0 0.0
  %v1577 = vand.u32 %v398, 4294901760
  %v1578 = vsub.f32 %v398, %v1577
  %v1579 = vand.u32 %v1578, 4294901760
  %1580 = vmatmul.mubr.f32.gmra.mrb[0].mxu0 %v1579
  %v1581 = vpop.f32.mrb[0].mxu0
  %v1582 = vadd.f32 %v1303, %v1581
  %v1583 = vpop.f32.mrb[0].mxu0
  %1584 = vmatprep.mubr.f32.mxu0 0.0
  %v1585 = vand.u32 %v399, 4294901760
  %v1586 = vsub.f32 %v399, %v1585
  %v1587 = vand.u32 %v1586, 4294901760
  %1588 = vmatmul.mubr.f32.gmra.mrb[0].mxu0 %v1587
  %v1589 = vpop.f32.mrb[0].mxu0
  %v1590 = vadd.f32 %v1310, %v1589
  %v1591 = vpop.f32.mrb[0].mxu0
  %1592 = vmatprep.mubr.f32.mxu0 0.0
  %v1593 = vand.u32 %v400, 4294901760
  %v1594 = vsub.f32 %v400, %v1593
  %v1595 = vand.u32 %v1594, 4294901760
  %1596 = vmatmul.mubr.f32.gmra.mrb[0].mxu0 %v1595
  %v1597 = vpop.f32.mrb[0].mxu0
  %v1598 = vadd.f32 %v1317, %v1597
  %v1599 = vpop.f32.mrb[0].mxu0
  %1600 = vdwg.mxu0
  %1601 = vmatprep.subr.mxu0 0.0
  %v1602 = vand.u32 %v401, 4294901760
  %v1603 = vsub.f32 %v401, %v1602
  %v1604 = vand.u32 %v1603, 4294901760
  %1605 = vmatpush1.msra.mxu0 %v1604
  %1606 = vmatprep.subr.mxu0 0.0
  %v1607 = vand.u32 %v402, 4294901760
  %v1608 = vsub.f32 %v402, %v1607
  %v1609 = vand.u32 %v1608, 4294901760
  %1610 = vmatpush1.msra.mxu0 %v1609
  %1611 = vmatprep.subr.mxu0 0.0
  %v1612 = vand.u32 %v403, 4294901760
  %v1613 = vsub.f32 %v403, %v1612
  %v1614 = vand.u32 %v1613, 4294901760
  %1615 = vmatpush1.msra.mxu0 %v1614
  %1616 = vmatprep.subr.mxu0 0.0
  %v1617 = vand.u32 %v404, 4294901760
  %v1618 = vsub.f32 %v404, %v1617
  %v1619 = vand.u32 %v1618, 4294901760
  %1620 = vmatpush1.msra.mxu0 %v1619
  %1621 = vmatprep.subr.mxu0 0.0
  %v1622 = vand.u32 %v405, 4294901760
  %v1623 = vsub.f32 %v405, %v1622
  %v1624 = vand.u32 %v1623, 4294901760
  %1625 = vmatpush1.msra.mxu0 %v1624
  %1626 = vmatprep.subr.mxu0 0.0
  %v1627 = vand.u32 %v406, 4294901760
  %v1628 = vsub.f32 %v406, %v1627
  %v1629 = vand.u32 %v1628, 4294901760
  %1630 = vmatpush1.msra.mxu0 %v1629
  %1631 = vmatprep.subr.mxu0 0.0
  %v1632 = vand.u32 %v407, 4294901760
  %v1633 = vsub.f32 %v407, %v1632
  %v1634 = vand.u32 %v1633, 4294901760
  %1635 = vmatpush1.msra.mxu0 %v1634
  %1636 = vmatprep.subr.mxu0 0.0
  %v1637 = vand.u32 %v408, 4294901760
  %v1638 = vsub.f32 %v408, %v1637
  %v1639 = vand.u32 %v1638, 4294901760
  %1640 = vmatpush1.msra.mxu0 %v1639
  %1641 = vmatprep.subr.mxu0 0.0
  %v1642 = vand.u32 %v409, 4294901760
  %v1643 = vsub.f32 %v409, %v1642
  %v1644 = vand.u32 %v1643, 4294901760
  %1645 = vmatpush1.msra.mxu0 %v1644
  %1646 = vmatprep.subr.mxu0 0.0
  %v1647 = vand.u32 %v410, 4294901760
  %v1648 = vsub.f32 %v410, %v1647
  %v1649 = vand.u32 %v1648, 4294901760
  %1650 = vmatpush1.msra.mxu0 %v1649
  %1651 = vmatprep.subr.mxu0 0.0
  %v1652 = vand.u32 %v411, 4294901760
  %v1653 = vsub.f32 %v411, %v1652
  %v1654 = vand.u32 %v1653, 4294901760
  %1655 = vmatpush1.msra.mxu0 %v1654
  %1656 = vmatprep.subr.mxu0 0.0
  %v1657 = vand.u32 %v412, 4294901760
  %v1658 = vsub.f32 %v412, %v1657
  %v1659 = vand.u32 %v1658, 4294901760
  %1660 = vmatpush1.msra.mxu0 %v1659
  %1661 = vmatprep.subr.mxu0 0.0
  %v1662 = vand.u32 %v413, 4294901760
  %v1663 = vsub.f32 %v413, %v1662
  %v1664 = vand.u32 %v1663, 4294901760
  %1665 = vmatpush1.msra.mxu0 %v1664
  %1666 = vmatprep.subr.mxu0 0.0
  %v1667 = vand.u32 %v414, 4294901760
  %v1668 = vsub.f32 %v414, %v1667
  %v1669 = vand.u32 %v1668, 4294901760
  %1670 = vmatpush1.msra.mxu0 %v1669
  %1671 = vmatprep.subr.mxu0 0.0
  %v1672 = vand.u32 %v415, 4294901760
  %v1673 = vsub.f32 %v415, %v1672
  %v1674 = vand.u32 %v1673, 4294901760
  %1675 = vmatpush1.msra.mxu0 %v1674
  %1676 = vmatprep.subr.mxu0 0.0
  %v1677 = vand.u32 %v416, 4294901760
  %v1678 = vsub.f32 %v416, %v1677
  %v1679 = vand.u32 %v1678, 4294901760
  %1680 = vmatpush1.msra.mxu0 %v1679
  %1681 = vmatprep.subr.mxu0 0.0
  %1682 = vmatpush1.msra.mxu0 0.0
  %1683 = vmatprep.subr.mxu0 0.0
  %1684 = vmatpush1.msra.mxu0 0.0
  %1685 = vmatprep.subr.mxu0 0.0
  %1686 = vmatpush1.msra.mxu0 0.0
  %1687 = vmatprep.subr.mxu0 0.0
  %1688 = vmatpush1.msra.mxu0 0.0
  %1689 = vmatprep.subr.mxu0 0.0
  %1690 = vmatpush1.msra.mxu0 0.0
  %1691 = vmatprep.subr.mxu0 0.0
  %1692 = vmatpush1.msra.mxu0 0.0
  %1693 = vmatprep.subr.mxu0 0.0
  %1694 = vmatpush1.msra.mxu0 0.0
  %1695 = vmatprep.subr.mxu0 0.0
  %1696 = vmatpush1.msra.mxu0 0.0
  %1697 = vmatprep.subr.mxu0 0.0
  %1698 = vmatpush1.msra.mxu0 0.0
  %1699 = vmatprep.subr.mxu0 0.0
  %1700 = vmatpush1.msra.mxu0 0.0
  %1701 = vmatprep.subr.mxu0 0.0
  %1702 = vmatpush1.msra.mxu0 0.0
  %1703 = vmatprep.subr.mxu0 0.0
  %1704 = vmatpush1.msra.mxu0 0.0
  %1705 = vmatprep.subr.mxu0 0.0
  %1706 = vmatpush1.msra.mxu0 0.0
  %1707 = vmatprep.subr.mxu0 0.0
  %1708 = vmatpush1.msra.mxu0 0.0
  %1709 = vmatprep.subr.mxu0 0.0
  %1710 = vmatpush1.msra.mxu0 0.0
  %1711 = vmatprep.subr.mxu0 0.0
  %1712 = vmatpush1.msra.mxu0 0.0
  %1713 = vmatprep.mubr.f32.mxu0 0.0
  %v1714 = vand.u32 %v376, 4294901760
  %1715 = vmatmul.mubr.f32.gmra.mrb[0].mxu0 %v1714
  %v1716 = vpop.f32.mrb[0].mxu0
  %v1717 = vadd.f32 %v1406, %v1716
  %v1718 = vpop.f32.mrb[0].mxu0
  %1719 = vmatprep.mubr.f32.mxu0 0.0
  %v1720 = vand.u32 %v377, 4294901760
  %1721 = vmatmul.mubr.f32.gmra.mrb[0].mxu0 %v1720
  %v1722 = vpop.f32.mrb[0].mxu0
  %v1723 = vadd.f32 %v1414, %v1722
  %v1724 = vpop.f32.mrb[0].mxu0
  %1725 = vmatprep.mubr.f32.mxu0 0.0
  %v1726 = vand.u32 %v378, 4294901760
  %1727 = vmatmul.mubr.f32.gmra.mrb[0].mxu0 %v1726
  %v1728 = vpop.f32.mrb[0].mxu0
  %v1729 = vadd.f32 %v1422, %v1728
  %v1730 = vpop.f32.mrb[0].mxu0
  %1731 = vmatprep.mubr.f32.mxu0 0.0
  %v1732 = vand.u32 %v379, 4294901760
  %1733 = vmatmul.mubr.f32.gmra.mrb[0].mxu0 %v1732
  %v1734 = vpop.f32.mrb[0].mxu0
  %v1735 = vadd.f32 %v1430, %v1734
  %v1736 = vpop.f32.mrb[0].mxu0
  %1737 = vmatprep.mubr.f32.mxu0 0.0
  %v1738 = vand.u32 %v380, 4294901760
  %1739 = vmatmul.mubr.f32.gmra.mrb[0].mxu0 %v1738
  %v1740 = vpop.f32.mrb[0].mxu0
  %v1741 = vadd.f32 %v1438, %v1740
  %v1742 = vpop.f32.mrb[0].mxu0
  %1743 = vmatprep.mubr.f32.mxu0 0.0
  %v1744 = vand.u32 %v381, 4294901760
  %1745 = vmatmul.mubr.f32.gmra.mrb[0].mxu0 %v1744
  %v1746 = vpop.f32.mrb[0].mxu0
  %v1747 = vadd.f32 %v1446, %v1746
  %v1748 = vpop.f32.mrb[0].mxu0
  %1749 = vmatprep.mubr.f32.mxu0 0.0
  %v1750 = vand.u32 %v382, 4294901760
  %1751 = vmatmul.mubr.f32.gmra.mrb[0].mxu0 %v1750
  %v1752 = vpop.f32.mrb[0].mxu0
  %v1753 = vadd.f32 %v1454, %v1752
  %v1754 = vpop.f32.mrb[0].mxu0
  %1755 = vmatprep.mubr.f32.mxu0 0.0
  %v1756 = vand.u32 %v383, 4294901760
  %1757 = vmatmul.mubr.f32.gmra.mrb[0].mxu0 %v1756
  %v1758 = vpop.f32.mrb[0].mxu0
  %v1759 = vadd.f32 %v1462, %v1758
  %v1760 = vpop.f32.mrb[0].mxu0
  %1761 = vmatprep.mubr.f32.mxu0 0.0
  %v1762 = vand.u32 %v384, 4294901760
  %1763 = vmatmul.mubr.f32.gmra.mrb[0].mxu0 %v1762
  %v1764 = vpop.f32.mrb[0].mxu0
  %v1765 = vadd.f32 %v1470, %v1764
  %v1766 = vpop.f32.mrb[0].mxu0
  %1767 = vmatprep.mubr.f32.mxu0 0.0
  %v1768 = vand.u32 %v385, 4294901760
  %1769 = vmatmul.mubr.f32.gmra.mrb[0].mxu0 %v1768
  %v1770 = vpop.f32.mrb[0].mxu0
  %v1771 = vadd.f32 %v1478, %v1770
  %v1772 = vpop.f32.mrb[0].mxu0
  %1773 = vmatprep.mubr.f32.mxu0 0.0
  %v1774 = vand.u32 %v386, 4294901760
  %1775 = vmatmul.mubr.f32.gmra.mrb[0].mxu0 %v1774
  %v1776 = vpop.f32.mrb[0].mxu0
  %v1777 = vadd.f32 %v1486, %v1776
  %v1778 = vpop.f32.mrb[0].mxu0
  %1779 = vmatprep.mubr.f32.mxu0 0.0
  %v1780 = vand.u32 %v387, 4294901760
  %1781 = vmatmul.mubr.f32.gmra.mrb[0].mxu0 %v1780
  %v1782 = vpop.f32.mrb[0].mxu0
  %v1783 = vadd.f32 %v1494, %v1782
  %v1784 = vpop.f32.mrb[0].mxu0
  %1785 = vmatprep.mubr.f32.mxu0 0.0
  %v1786 = vand.u32 %v388, 4294901760
  %1787 = vmatmul.mubr.f32.gmra.mrb[0].mxu0 %v1786
  %v1788 = vpop.f32.mrb[0].mxu0
  %v1789 = vadd.f32 %v1502, %v1788
  %v1790 = vpop.f32.mrb[0].mxu0
  %1791 = vmatprep.mubr.f32.mxu0 0.0
  %v1792 = vand.u32 %v389, 4294901760
  %1793 = vmatmul.mubr.f32.gmra.mrb[0].mxu0 %v1792
  %v1794 = vpop.f32.mrb[0].mxu0
  %v1795 = vadd.f32 %v1510, %v1794
  %v1796 = vpop.f32.mrb[0].mxu0
  %1797 = vmatprep.mubr.f32.mxu0 0.0
  %v1798 = vand.u32 %v390, 4294901760
  %1799 = vmatmul.mubr.f32.gmra.mrb[0].mxu0 %v1798
  %v1800 = vpop.f32.mrb[0].mxu0
  %v1801 = vadd.f32 %v1518, %v1800
  %v1802 = vpop.f32.mrb[0].mxu0
  %1803 = vmatprep.mubr.f32.mxu0 0.0
  %v1804 = vand.u32 %v391, 4294901760
  %1805 = vmatmul.mubr.f32.gmra.mrb[0].mxu0 %v1804
  %v1806 = vpop.f32.mrb[0].mxu0
  %v1807 = vadd.f32 %v1526, %v1806
  %v1808 = vpop.f32.mrb[0].mxu0
  %1809 = vmatprep.mubr.f32.mxu0 0.0
  %v1810 = vand.u32 %v392, 4294901760
  %1811 = vmatmul.mubr.f32.gmra.mrb[0].mxu0 %v1810
  %v1812 = vpop.f32.mrb[0].mxu0
  %v1813 = vadd.f32 %v1534, %v1812
  %v1814 = vpop.f32.mrb[0].mxu0
  %1815 = vmatprep.mubr.f32.mxu0 0.0
  %v1816 = vand.u32 %v393, 4294901760
  %1817 = vmatmul.mubr.f32.gmra.mrb[0].mxu0 %v1816
  %v1818 = vpop.f32.mrb[0].mxu0
  %v1819 = vadd.f32 %v1542, %v1818
  %v1820 = vpop.f32.mrb[0].mxu0
  %1821 = vmatprep.mubr.f32.mxu0 0.0
  %v1822 = vand.u32 %v394, 4294901760
  %1823 = vmatmul.mubr.f32.gmra.mrb[0].mxu0 %v1822
  %v1824 = vpop.f32.mrb[0].mxu0
  %v1825 = vadd.f32 %v1550, %v1824
  %v1826 = vpop.f32.mrb[0].mxu0
  %1827 = vmatprep.mubr.f32.mxu0 0.0
  %v1828 = vand.u32 %v395, 4294901760
  %1829 = vmatmul.mubr.f32.gmra.mrb[0].mxu0 %v1828
  %v1830 = vpop.f32.mrb[0].mxu0
  %v1831 = vadd.f32 %v1558, %v1830
  %v1832 = vpop.f32.mrb[0].mxu0
  %1833 = vmatprep.mubr.f32.mxu0 0.0
  %v1834 = vand.u32 %v396, 4294901760
  %1835 = vmatmul.mubr.f32.gmra.mrb[0].mxu0 %v1834
  %v1836 = vpop.f32.mrb[0].mxu0
  %v1837 = vadd.f32 %v1566, %v1836
  %v1838 = vpop.f32.mrb[0].mxu0
  %1839 = vmatprep.mubr.f32.mxu0 0.0
  %v1840 = vand.u32 %v397, 4294901760
  %1841 = vmatmul.mubr.f32.gmra.mrb[0].mxu0 %v1840
  %v1842 = vpop.f32.mrb[0].mxu0
  %v1843 = vadd.f32 %v1574, %v1842
  %v1844 = vpop.f32.mrb[0].mxu0
  %1845 = vmatprep.mubr.f32.mxu0 0.0
  %v1846 = vand.u32 %v398, 4294901760
  %1847 = vmatmul.mubr.f32.gmra.mrb[0].mxu0 %v1846
  %v1848 = vpop.f32.mrb[0].mxu0
  %v1849 = vadd.f32 %v1582, %v1848
  %v1850 = vpop.f32.mrb[0].mxu0
  %1851 = vmatprep.mubr.f32.mxu0 0.0
  %v1852 = vand.u32 %v399, 4294901760
  %1853 = vmatmul.mubr.f32.gmra.mrb[0].mxu0 %v1852
  %v1854 = vpop.f32.mrb[0].mxu0
  %v1855 = vadd.f32 %v1590, %v1854
  %v1856 = vpop.f32.mrb[0].mxu0
  %1857 = vmatprep.mubr.f32.mxu0 0.0
  %v1858 = vand.u32 %v400, 4294901760
  %1859 = vmatmul.mubr.f32.gmra.mrb[0].mxu0 %v1858
  %v1860 = vpop.f32.mrb[0].mxu0
  %v1861 = vadd.f32 %v1598, %v1860
  %v1862 = vpop.f32.mrb[0].mxu0
  %1863 = vdwg.mxu0
  %1864 = vmatprep.subr.mxu0 0.0
  %v1865 = vand.u32 %v401, 4294901760
  %1866 = vmatpush1.msra.mxu0 %v1865
  %1867 = vmatprep.subr.mxu0 0.0
  %v1868 = vand.u32 %v402, 4294901760
  %1869 = vmatpush1.msra.mxu0 %v1868
  %1870 = vmatprep.subr.mxu0 0.0
  %v1871 = vand.u32 %v403, 4294901760
  %1872 = vmatpush1.msra.mxu0 %v1871
  %1873 = vmatprep.subr.mxu0 0.0
  %v1874 = vand.u32 %v404, 4294901760
  %1875 = vmatpush1.msra.mxu0 %v1874
  %1876 = vmatprep.subr.mxu0 0.0
  %v1877 = vand.u32 %v405, 4294901760
  %1878 = vmatpush1.msra.mxu0 %v1877
  %1879 = vmatprep.subr.mxu0 0.0
  %v1880 = vand.u32 %v406, 4294901760
  %1881 = vmatpush1.msra.mxu0 %v1880
  %1882 = vmatprep.subr.mxu0 0.0
  %v1883 = vand.u32 %v407, 4294901760
  %1884 = vmatpush1.msra.mxu0 %v1883
  %1885 = vmatprep.subr.mxu0 0.0
  %v1886 = vand.u32 %v408, 4294901760
  %1887 = vmatpush1.msra.mxu0 %v1886
  %1888 = vmatprep.subr.mxu0 0.0
  %v1889 = vand.u32 %v409, 4294901760
  %1890 = vmatpush1.msra.mxu0 %v1889
  %1891 = vmatprep.subr.mxu0 0.0
  %v1892 = vand.u32 %v410, 4294901760
  %1893 = vmatpush1.msra.mxu0 %v1892
  %1894 = vmatprep.subr.mxu0 0.0
  %v1895 = vand.u32 %v411, 4294901760
  %1896 = vmatpush1.msra.mxu0 %v1895
  %1897 = vmatprep.subr.mxu0 0.0
  %v1898 = vand.u32 %v412, 4294901760
  %1899 = vmatpush1.msra.mxu0 %v1898
  %1900 = vmatprep.subr.mxu0 0.0
  %v1901 = vand.u32 %v413, 4294901760
  %1902 = vmatpush1.msra.mxu0 %v1901
  %1903 = vmatprep.subr.mxu0 0.0
  %v1904 = vand.u32 %v414, 4294901760
  %1905 = vmatpush1.msra.mxu0 %v1904
  %1906 = vmatprep.subr.mxu0 0.0
  %v1907 = vand.u32 %v415, 4294901760
  %1908 = vmatpush1.msra.mxu0 %v1907
  %1909 = vmatprep.subr.mxu0 0.0
  %v1910 = vand.u32 %v416, 4294901760
  %1911 = vmatpush1.msra.mxu0 %v1910
  %1912 = vmatprep.subr.mxu0 0.0
  %1913 = vmatpush1.msra.mxu0 0.0
  %1914 = vmatprep.subr.mxu0 0.0
  %1915 = vmatpush1.msra.mxu0 0.0
  %1916 = vmatprep.subr.mxu0 0.0
  %1917 = vmatpush1.msra.mxu0 0.0
  %1918 = vmatprep.subr.mxu0 0.0
  %1919 = vmatpush1.msra.mxu0 0.0
  %1920 = vmatprep.subr.mxu0 0.0
  %1921 = vmatpush1.msra.mxu0 0.0
  %1922 = vmatprep.subr.mxu0 0.0
  %1923 = vmatpush1.msra.mxu0 0.0
  %1924 = vmatprep.subr.mxu0 0.0
  %1925 = vmatpush1.msra.mxu0 0.0
  %1926 = vmatprep.subr.mxu0 0.0
  %1927 = vmatpush1.msra.mxu0 0.0
  %1928 = vmatprep.subr.mxu0 0.0
  %1929 = vmatpush1.msra.mxu0 0.0
  %1930 = vmatprep.subr.mxu0 0.0
  %1931 = vmatpush1.msra.mxu0 0.0
  %1932 = vmatprep.subr.mxu0 0.0
  %1933 = vmatpush1.msra.mxu0 0.0
  %1934 = vmatprep.subr.mxu0 0.0
  %1935 = vmatpush1.msra.mxu0 0.0
  %1936 = vmatprep.subr.mxu0 0.0
  %1937 = vmatpush1.msra.mxu0 0.0
  %1938 = vmatprep.subr.mxu0 0.0
  %1939 = vmatpush1.msra.mxu0 0.0
  %1940 = vmatprep.subr.mxu0 0.0
  %1941 = vmatpush1.msra.mxu0 0.0
  %1942 = vmatprep.subr.mxu0 0.0
  %1943 = vmatpush1.msra.mxu0 0.0
  %1944 = vmatprep.mubr.f32.mxu0 0.0
  %v1945 = vand.u32 %v376, 4294901760
  %1946 = vmatmul.mubr.f32.gmra.mrb[0].mxu0 %v1945
  %v1947 = vpop.f32.mrb[0].mxu0
  %v1948 = vadd.f32 %v1717, %v1947
  %v1949 = vpop.f32.mrb[0].mxu0
  %1950 = vmatprep.mubr.f32.mxu0 0.0
  %v1951 = vand.u32 %v377, 4294901760
  %1952 = vmatmul.mubr.f32.gmra.mrb[0].mxu0 %v1951
  %v1953 = vpop.f32.mrb[0].mxu0
  %v1954 = vadd.f32 %v1723, %v1953
  %v1955 = vpop.f32.mrb[0].mxu0
  %1956 = vmatprep.mubr.f32.mxu0 0.0
  %v1957 = vand.u32 %v378, 4294901760
  %1958 = vmatmul.mubr.f32.gmra.mrb[0].mxu0 %v1957
  %v1959 = vpop.f32.mrb[0].mxu0
  %v1960 = vadd.f32 %v1729, %v1959
  %v1961 = vpop.f32.mrb[0].mxu0
  %1962 = vmatprep.mubr.f32.mxu0 0.0
  %v1963 = vand.u32 %v379, 4294901760
  %1964 = vmatmul.mubr.f32.gmra.mrb[0].mxu0 %v1963
  %v1965 = vpop.f32.mrb[0].mxu0
  %v1966 = vadd.f32 %v1735, %v1965
  %v1967 = vpop.f32.mrb[0].mxu0
  %1968 = vmatprep.mubr.f32.mxu0 0.0
  %v1969 = vand.u32 %v380, 4294901760
  %1970 = vmatmul.mubr.f32.gmra.mrb[0].mxu0 %v1969
  %v1971 = vpop.f32.mrb[0].mxu0
  %v1972 = vadd.f32 %v1741, %v1971
  %v1973 = vpop.f32.mrb[0].mxu0
  %1974 = vmatprep.mubr.f32.mxu0 0.0
  %v1975 = vand.u32 %v381, 4294901760
  %1976 = vmatmul.mubr.f32.gmra.mrb[0].mxu0 %v1975
  %v1977 = vpop.f32.mrb[0].mxu0
  %v1978 = vadd.f32 %v1747, %v1977
  %v1979 = vpop.f32.mrb[0].mxu0
  %1980 = vmatprep.mubr.f32.mxu0 0.0
  %v1981 = vand.u32 %v382, 4294901760
  %1982 = vmatmul.mubr.f32.gmra.mrb[0].mxu0 %v1981
  %v1983 = vpop.f32.mrb[0].mxu0
  %v1984 = vadd.f32 %v1753, %v1983
  %v1985 = vpop.f32.mrb[0].mxu0
  %1986 = vmatprep.mubr.f32.mxu0 0.0
  %v1987 = vand.u32 %v383, 4294901760
  %1988 = vmatmul.mubr.f32.gmra.mrb[0].mxu0 %v1987
  %v1989 = vpop.f32.mrb[0].mxu0
  %v1990 = vadd.f32 %v1759, %v1989
  %v1991 = vpop.f32.mrb[0].mxu0
  %1992 = vmatprep.mubr.f32.mxu0 0.0
  %v1993 = vand.u32 %v384, 4294901760
  %1994 = vmatmul.mubr.f32.gmra.mrb[0].mxu0 %v1993
  %v1995 = vpop.f32.mrb[0].mxu0
  %v1996 = vadd.f32 %v1765, %v1995
  %v1997 = vpop.f32.mrb[0].mxu0
  %1998 = vmatprep.mubr.f32.mxu0 0.0
  %v1999 = vand.u32 %v385, 4294901760
  %2000 = vmatmul.mubr.f32.gmra.mrb[0].mxu0 %v1999
  %v2001 = vpop.f32.mrb[0].mxu0
  %v2002 = vadd.f32 %v1771, %v2001
  %v2003 = vpop.f32.mrb[0].mxu0
  %2004 = vmatprep.mubr.f32.mxu0 0.0
  %v2005 = vand.u32 %v386, 4294901760
  %2006 = vmatmul.mubr.f32.gmra.mrb[0].mxu0 %v2005
  %v2007 = vpop.f32.mrb[0].mxu0
  %v2008 = vadd.f32 %v1777, %v2007
  %v2009 = vpop.f32.mrb[0].mxu0
  %2010 = vmatprep.mubr.f32.mxu0 0.0
  %v2011 = vand.u32 %v387, 4294901760
  %2012 = vmatmul.mubr.f32.gmra.mrb[0].mxu0 %v2011
  %v2013 = vpop.f32.mrb[0].mxu0
  %v2014 = vadd.f32 %v1783, %v2013
  %v2015 = vpop.f32.mrb[0].mxu0
  %2016 = vmatprep.mubr.f32.mxu0 0.0
  %v2017 = vand.u32 %v388, 4294901760
  %2018 = vmatmul.mubr.f32.gmra.mrb[0].mxu0 %v2017
  %v2019 = vpop.f32.mrb[0].mxu0
  %v2020 = vadd.f32 %v1789, %v2019
  %v2021 = vpop.f32.mrb[0].mxu0
  %2022 = vmatprep.mubr.f32.mxu0 0.0
  %v2023 = vand.u32 %v389, 4294901760
  %2024 = vmatmul.mubr.f32.gmra.mrb[0].mxu0 %v2023
  %v2025 = vpop.f32.mrb[0].mxu0
  %v2026 = vadd.f32 %v1795, %v2025
  %v2027 = vpop.f32.mrb[0].mxu0
  %2028 = vmatprep.mubr.f32.mxu0 0.0
  %v2029 = vand.u32 %v390, 4294901760
  %2030 = vmatmul.mubr.f32.gmra.mrb[0].mxu0 %v2029
  %v2031 = vpop.f32.mrb[0].mxu0
  %v2032 = vadd.f32 %v1801, %v2031
  %v2033 = vpop.f32.mrb[0].mxu0
  %2034 = vmatprep.mubr.f32.mxu0 0.0
  %v2035 = vand.u32 %v391, 4294901760
  %2036 = vmatmul.mubr.f32.gmra.mrb[0].mxu0 %v2035
  %v2037 = vpop.f32.mrb[0].mxu0
  %v2038 = vadd.f32 %v1807, %v2037
  %v2039 = vpop.f32.mrb[0].mxu0
  %2040 = vmatprep.mubr.f32.mxu0 0.0
  %v2041 = vand.u32 %v392, 4294901760
  %2042 = vmatmul.mubr.f32.gmra.mrb[0].mxu0 %v2041
  %v2043 = vpop.f32.mrb[0].mxu0
  %v2044 = vadd.f32 %v1813, %v2043
  %v2045 = vpop.f32.mrb[0].mxu0
  %2046 = vmatprep.mubr.f32.mxu0 0.0
  %v2047 = vand.u32 %v393, 4294901760
  %2048 = vmatmul.mubr.f32.gmra.mrb[0].mxu0 %v2047
  %v2049 = vpop.f32.mrb[0].mxu0
  %v2050 = vadd.f32 %v1819, %v2049
  %v2051 = vpop.f32.mrb[0].mxu0
  %2052 = vmatprep.mubr.f32.mxu0 0.0
  %v2053 = vand.u32 %v394, 4294901760
  %2054 = vmatmul.mubr.f32.gmra.mrb[0].mxu0 %v2053
  %v2055 = vpop.f32.mrb[0].mxu0
  %v2056 = vadd.f32 %v1825, %v2055
  %v2057 = vpop.f32.mrb[0].mxu0
  %2058 = vmatprep.mubr.f32.mxu0 0.0
  %v2059 = vand.u32 %v395, 4294901760
  %2060 = vmatmul.mubr.f32.gmra.mrb[0].mxu0 %v2059
  %v2061 = vpop.f32.mrb[0].mxu0
  %v2062 = vadd.f32 %v1831, %v2061
  %v2063 = vpop.f32.mrb[0].mxu0
  %2064 = vmatprep.mubr.f32.mxu0 0.0
  %v2065 = vand.u32 %v396, 4294901760
  %2066 = vmatmul.mubr.f32.gmra.mrb[0].mxu0 %v2065
  %v2067 = vpop.f32.mrb[0].mxu0
  %v2068 = vadd.f32 %v1837, %v2067
  %v2069 = vpop.f32.mrb[0].mxu0
  %2070 = vmatprep.mubr.f32.mxu0 0.0
  %v2071 = vand.u32 %v397, 4294901760
  %2072 = vmatmul.mubr.f32.gmra.mrb[0].mxu0 %v2071
  %v2073 = vpop.f32.mrb[0].mxu0
  %v2074 = vadd.f32 %v1843, %v2073
  %v2075 = vpop.f32.mrb[0].mxu0
  %2076 = vmatprep.mubr.f32.mxu0 0.0
  %v2077 = vand.u32 %v398, 4294901760
  %2078 = vmatmul.mubr.f32.gmra.mrb[0].mxu0 %v2077
  %v2079 = vpop.f32.mrb[0].mxu0
  %v2080 = vadd.f32 %v1849, %v2079
  %v2081 = vpop.f32.mrb[0].mxu0
  %2082 = vmatprep.mubr.f32.mxu0 0.0
  %v2083 = vand.u32 %v399, 4294901760
  %2084 = vmatmul.mubr.f32.gmra.mrb[0].mxu0 %v2083
  %v2085 = vpop.f32.mrb[0].mxu0
  %v2086 = vadd.f32 %v1855, %v2085
  %v2087 = vpop.f32.mrb[0].mxu0
  %2088 = vmatprep.mubr.f32.mxu0 0.0
  %v2089 = vand.u32 %v400, 4294901760
  %2090 = vmatmul.mubr.f32.gmra.mrb[0].mxu0 %v2089
  %v2091 = vpop.f32.mrb[0].mxu0
  %v2092 = vadd.f32 %v1861, %v2091
  %v2093 = vpop.f32.mrb[0].mxu0
  %2094 = vdwg.mxu0
  %2095 = vst [vmem:[%s2] sm:$0xff] %v1948
  %2096 = vst [vmem:[%s2 + $0x8] sm:$0xff] %v1954
  %2097 = vst [vmem:[%s2 + $0x10] sm:$0xff] %v1960
  %2098 = vst [vmem:[%s2 + $0x18] sm:$0xff] %v1966
  %2099 = vst [vmem:[%s2 + $0x20] sm:$0xff] %v1972
  %2100 = vst [vmem:[%s2 + $0x28] sm:$0xff] %v1978
  %2101 = vst [vmem:[%s2 + $0x30] sm:$0xff] %v1984
  %2102 = vst [vmem:[%s2 + $0x38] sm:$0xff] %v1990
  %2103 = vst [vmem:[%s2 + $0x40] sm:$0xff] %v1996
  %2104 = vst [vmem:[%s2 + $0x48] sm:$0xff] %v2002
  %2105 = vst [vmem:[%s2 + $0x50] sm:$0xff] %v2008
  %2106 = vst [vmem:[%s2 + $0x58] sm:$0xff] %v2014
  %2107 = vst [vmem:[%s2 + $0x60] sm:$0xff] %v2020
  %2108 = vst [vmem:[%s2 + $0x68] sm:$0xff] %v2026
  %2109 = vst [vmem:[%s2 + $0x70] sm:$0xff] %v2032
  %2110 = vst [vmem:[%s2 + $0x78] sm:$0xff] %v2038
  %2111 = vst [vmem:[%s2 + $0x80] sm:$0xff] %v2044
  %2112 = vst [vmem:[%s2 + $0x88] sm:$0xff] %v2050
  %2113 = vst [vmem:[%s2 + $0x90] sm:$0xff] %v2056
  %2114 = vst [vmem:[%s2 + $0x98] sm:$0xff] %v2062
  %2115 = vst [vmem:[%s2 + $0xa0] sm:$0xff] %v2068
  %2116 = vst [vmem:[%s2 + $0xa8] sm:$0xff] %v2074
  %2117 = vst [vmem:[%s2 + $0xb0] sm:$0xff] %v2080
  %2118 = vst [vmem:[%s2 + $0xb8] sm:$0xff] %v2086
  %2119 = vst [vmem:[%s2 + $0xc0] sm:$0xff] %v2092
  // Predicated region
  $region10: #{_forward_impl.1} parent=0 // pred_check
    _
  $region11: #{_forward_impl.1} parent=0 // pred_check_branch
    %2121 = sbr.rel (0) target = $region13
  $region12: #{_forward_impl.1} parent=0 // pred_region
    _
  $region13: #{_forward_impl.1} parent=0 // pred_fallthru
    _
  // Predicated region
  $region14: #{_forward_impl.1} parent=0 // pred_check
    _
  $region15: #{_forward_impl.1} parent=0 // pred_check_branch
    %2123 = sbr.rel (0) target = $region17
  $region16: #{_forward_impl.1} parent=0 // pred_region
    _
  $region17: #{_forward_impl.1} parent=0 // pred_fallthru
    _

</llo_original>
